<compile_context>
chip_gen: v5e
topology: v5e:2x2
jax: 0.10.0
libtpu: 0.0.40
codegen_flags: <defaults>
</compile_context>

<pallas_src>
import functools

import jax
import jax.numpy as jnp
from jax import lax
from jax.experimental import pallas as pl
from jax.experimental.pallas import tpu as pltpu


def _round_up(x, m):
    return ((x + m - 1) // m) * m


def _choose_group_size(num_heads, head_dim, target_lanes):
    """Smallest divisor G of num_heads with G*head_dim >= target_lanes, else all heads."""
    for g in range(1, num_heads + 1):
        if num_heads % g == 0 and g * head_dim >= target_lanes:
            return g
    return num_heads


def _physical_vmem_bytes():
    try:
        return int(pltpu.get_tpu_info().vmem_capacity_bytes)
    except Exception:
        return 128 * 1024 * 1024  # v5e/v6e default; the 0.8 cap keeps headroom anyway


def _mhsa_group_kernel(x_ref, wqkv_ref, bqkv_ref, wp_ref, bp_ref, o_ref, acc_ref, *,
                       num_groups, heads_per_group, head_dim, n_real, compute_dtype):
    """One (batch, head-group) grid step of fused multi-head self-attention.

    x_ref    : (1, N_pad, C_pad)        input tile (compute_dtype), resident across groups
    wqkv_ref : (1, C_pad, 3*G*hd)       this group's fused QKV weights (compute_dtype,
                                        qk scale pre-folded into the q columns)
    bqkv_ref : (1, 1, 3*G*hd)           fused QKV bias (f32, scale folded into q part)
    wp_ref   : (1, G*hd, C_pad)         this group's rows of the output projection
    bp_ref   : (1, C_pad)               output projection bias (f32)
    o_ref    : (1, N_pad, C_pad)        output tile (written once, on the last group)
    acc_ref  : (N_pad, C_pad) f32       VMEM accumulator, persistent across the group axis
    """
    g = pl.program_id(1)

    @pl.when(g == 0)
    def _init():
        acc_ref[...] = jnp.zeros_like(acc_ref)

    xb = x_ref[0]                                   # (N_pad, C_pad), already compute_dtype
    n_pad = xb.shape[0]
    gh = heads_per_group * head_dim

    # Fused lane-dense QKV projection for the whole head group (MXU, f32 accumulate).
    qkv = jnp.dot(xb, wqkv_ref[0], preferred_element_type=jnp.float32) + bqkv_ref[0]

    need_mask = n_real < n_pad
    if need_mask:
        # Mask padded key columns so they contribute exp(-inf)=0 to the softmax.
        key_mask = lax.broadcasted_iota(jnp.int32, (n_pad, n_pad), 1) < n_real

    ctx_heads = []
    for h in range(heads_per_group):                # G is small & static
        lo = h * head_dim
        q = qkv[:, lo:lo + head_dim]                              # (N, hd), scale folded in
        k = qkv[:, gh + lo:gh + lo + head_dim]
        v = qkv[:, 2 * gh + lo:2 * gh + lo + head_dim]

        # scores = q @ k^T via dot_general contracting hd (no explicit K transpose).
        s = lax.dot_general(q.astype(compute_dtype), k.astype(compute_dtype),
                            dimension_numbers=(((1,), (1,)), ((), ())),
                            preferred_element_type=jnp.float32)   # (N, N) f32
        if need_mask:
            s = jnp.where(key_mask, s, jnp.float32(-1e30))

        # Numerically-stable softmax; single (N, N) probability buffer in compute_dtype,
        # row-sum accumulated in f32, normalization deferred to the (N, hd) context.
        m = jnp.max(s, axis=-1, keepdims=True)
        p = jnp.exp(s - m).astype(compute_dtype)
        denom = jnp.sum(p, axis=-1, keepdims=True, dtype=jnp.float32)

        ctx = jnp.dot(p, v.astype(compute_dtype),
                      preferred_element_type=jnp.float32)          # (N, hd) f32
        ctx = ctx * pl.reciprocal(denom, approx=True)              # EUP slot
        ctx_heads.append(ctx.astype(compute_dtype))

    ctx_group = ctx_heads[0] if heads_per_group == 1 else jnp.concatenate(ctx_heads, axis=-1)

    # Depth-dense output projection for the whole group, accumulated in f32.
    acc_ref[...] += jnp.dot(ctx_group, wp_ref[0], preferred_element_type=jnp.float32)

    @pl.when(g == num_groups - 1)
    def _finalize():
        o_ref[0] = (acc_ref[...] + bp_ref[...]).astype(o_ref.dtype)


def mhsa_forward(x, mask, params, *, num_heads, qk_scale=None,
                 compute_dtype=jnp.bfloat16, mxu_lane_target=256):
    """JAX wrapper.

    `mask` is accepted but IGNORED — exactly like the reference PyTorch forward,
    which takes `mask` and never uses it. Set mxu_lane_target=128 on v5e.
    """
    del mask  # intentionally unused (matches the PyTorch module)

    B, N, C = x.shape
    if C % num_heads != 0:
        raise ValueError(f"C={C} must be divisible by num_heads={num_heads}")
    hd = C // num_heads
    scale = float(qk_scale) if qk_scale is not None else hd ** (-0.5)

    G = _choose_group_size(num_heads, hd, mxu_lane_target)
    num_groups = num_heads // G
    gh = G * hd

    # Lane-dense padded shapes presented to the kernel (128 is also a multiple of
    # the bf16 sublane quantum 16). Padded queries/channels are sliced off below;
    # padded keys are masked in-kernel.
    N_pad = _round_up(N, 128)
    C_pad = _round_up(C, 128)

    out_dtype = x.dtype

    # ---- head-group weight repack + scale folding (outside the kernel) ----
    wqkv_t = params["wqkv_t"]        # (C, 3C), columns = [q | k | v], head-major inside
    bqkv = params["bqkv"]            # (3C,)
    wproj_t = params["wproj_t"]      # (C, C)
    bproj = params["bproj"]          # (C,)

    wq = wqkv_t[:, :C].reshape(C, num_heads, hd) * scale   # fold qk scale into q
    wk = wqkv_t[:, C:2 * C].reshape(C, num_heads, hd)
    wv = wqkv_t[:, 2 * C:].reshape(C, num_heads, hd)
    bq = bqkv[:C].reshape(num_heads, hd) * scale
    bk = bqkv[C:2 * C].reshape(num_heads, hd)
    bv = bqkv[2 * C:].reshape(num_heads, hd)

    def group_w(w):   # (C, H, hd) -> (num_groups, C, G*hd)
        return w.reshape(C, num_groups, G, hd).transpose(1, 0, 2, 3).reshape(num_groups, C, gh)

    def group_b(b):   # (H, hd) -> (num_groups, 1, G*hd)
        return b.reshape(num_groups, 1, gh)

    wqkv_g = jnp.concatenate([group_w(wq), group_w(wk), group_w(wv)], axis=-1)  # (Gn, C, 3*G*hd)
    wqkv_g = jnp.pad(wqkv_g, ((0, 0), (0, C_pad - C), (0, 0))).astype(compute_dtype)
    bqkv_g = jnp.concatenate([group_b(bq), group_b(bk), group_b(bv)],
                             axis=-1).astype(jnp.float32)                        # (Gn, 1, 3*G*hd)

    wp_g = wproj_t.reshape(num_groups, gh, C)                                    # (Gn, G*hd, C)
    wp_g = jnp.pad(wp_g, ((0, 0), (0, 0), (0, C_pad - C))).astype(compute_dtype)
    bp = jnp.pad(bproj, (0, C_pad - C)).reshape(1, C_pad).astype(jnp.float32)

    # Pre-cast + pad x (halves x DMA bytes, removes per-step in-kernel cast).
    x_p = jnp.pad(x, ((0, 0), (0, N_pad - N), (0, C_pad - C))).astype(compute_dtype)

    # ---- VMEM budget: accurate per-step live set, generation-aware cap ----
    wbytes = jnp.dtype(compute_dtype).itemsize
    xbytes_in = wbytes
    xbytes_out = jnp.dtype(out_dtype).itemsize
    blocks = 2 * (                                  # 2x double-buffered pipeline blocks
        N_pad * C_pad * xbytes_in                   #   x
        + C_pad * 3 * gh * wbytes                   #   wqkv group
        + 3 * gh * 4                                #   bqkv group
        + gh * C_pad * wbytes                       #   wproj group
        + C_pad * 4                                 #   bproj
        + N_pad * C_pad * xbytes_out)               #   out
    scratch = N_pad * C_pad * 4                     # f32 accumulator
    live = (N_pad * 3 * gh * 4                      # qkv (f32)
            + N_pad * N_pad * 4                     # scores (f32)
            + N_pad * N_pad * wbytes                # probs (compute dtype)
            + 3 * N_pad * hd * wbytes               # q/k/v casts of one head
            + (G + 1) * N_pad * hd * 4              # per-head f32 contexts kept until concat
            + N_pad * gh * wbytes)                  # concatenated group context
    est = blocks + scratch + live

    phys = _physical_vmem_bytes()
    cap = int(phys * 0.80)                          # headroom for compiler-internal scratch
    vmem_limit = int(min(cap, max(32 * 1024 * 1024, int(1.25 * est))))

    kernel = functools.partial(
        _mhsa_group_kernel, num_groups=num_groups, heads_per_group=G,
        head_dim=hd, n_real=N, compute_dtype=compute_dtype)

    out_padded = pl.pallas_call(
        kernel,
        out_shape=jax.ShapeDtypeStruct((B, N_pad, C_pad), out_dtype),
        grid_spec=pltpu.PrefetchScalarGridSpec(
            num_scalar_prefetch=0,
            grid=(B, num_groups),                                  # group axis innermost
            in_specs=[
                pl.BlockSpec((1, N_pad, C_pad), lambda b, g: (b, 0, 0)),   # x (per batch)
                pl.BlockSpec((1, C_pad, 3 * gh), lambda b, g: (g, 0, 0)),  # wqkv group
                pl.BlockSpec((1, 1, 3 * gh), lambda b, g: (g, 0, 0)),      # bqkv group
                pl.BlockSpec((1, gh, C_pad), lambda b, g: (g, 0, 0)),      # wproj group
                pl.BlockSpec((1, C_pad), lambda b, g: (0, 0)),             # bproj
            ],
            out_specs=pl.BlockSpec((1, N_pad, C_pad), lambda b, g: (b, 0, 0)),
            scratch_shapes=[pltpu.VMEM((N_pad, C_pad), jnp.float32)],      # f32 accumulator
        ),
        compiler_params=pltpu.CompilerParams(
            dimension_semantics=("parallel", "arbitrary"),
            vmem_limit_bytes=vmem_limit),
    )(x_p, wqkv_g, bqkv_g, wp_g, bp)

    if N_pad == N and C_pad == C:
        return out_padded
    return out_padded[:, :N, :C]


def mhsa_reference(x, params, *, num_heads, qk_scale=None):
    """Pure-JAX f32 reference mirroring the PyTorch forward."""
    B, N, C = x.shape
    hd = C // num_heads
    scale = qk_scale if qk_scale is not None else hd ** (-0.5)

    qkv = x @ params["wqkv_t"] + params["bqkv"]                    # (B, N, 3C)
    qkv = qkv.reshape(B, N, 3, num_heads, hd).transpose(2, 0, 3, 1, 4)
    q, k, v = qkv[0], qkv[1], qkv[2]                               # (B, H, N, hd)
    attn = jax.nn.softmax((q * scale) @ jnp.swapaxes(k, -2, -1), axis=-1)
    out = (attn @ v).transpose(0, 2, 1, 3).reshape(B, N, C)        # (B, N, C)
    return out @ params["wproj_t"] + params["bproj"]


if __name__ == "__main__":
    # Small shapes consistent with the module's forward: x is (B, N, C).
    B, N, C = 2, 8, 32
    num_heads = 4

    key = jax.random.PRNGKey(0)
    kx, kw1, kb1, kw2, kb2 = jax.random.split(key, 5)

    x = jax.random.normal(kx, (B, N, C), dtype=jnp.float32)
    mask = None  # accepted but unused by the forward pass (matches the PyTorch module)

    # Deterministic parameter init (nn.Linear shapes: qkv (3C, C), proj (C, C)),
    # stored pre-transposed as (in, out).
    params = {
        "wqkv_t": jax.random.normal(kw1, (C, 3 * C), dtype=jnp.float32) * 0.05,
        "bqkv": jax.random.normal(kb1, (3 * C,), dtype=jnp.float32) * 0.05,
        "wproj_t": jax.random.normal(kw2, (C, C), dtype=jnp.float32) * 0.05,
        "bproj": jax.random.normal(kb2, (C,), dtype=jnp.float32) * 0.05,
    }

    out = mhsa_forward(x, mask, params, num_heads=num_heads)
    out = jax.block_until_ready(out)

    ref = mhsa_reference(x, params, num_heads=num_heads)
    assert out.shape == (B, N, C)
    # bf16 MXU operands / bf16 probs / approx reciprocal => loosened tolerance vs f32 ref.
    assert jnp.allclose(out, ref, atol=2e-2, rtol=2e-2), "mismatch vs JAX reference"

    print("KERNEL_OK")
</pallas_src>

<mosaic_0001>
module attributes {stable_mosaic.version = 11 : i64} {
  func.func @_mhsa_group_kernel(%arg0: i32, %arg1: i32, %arg2: memref<1x128x128xbf16, #tpu.memory_space<vmem>>, %arg3: memref<1x128x96xbf16, #tpu.memory_space<vmem>>, %arg4: memref<1x1x96xf32, #tpu.memory_space<vmem>>, %arg5: memref<1x32x128xbf16, #tpu.memory_space<vmem>>, %arg6: memref<1x128xf32, #tpu.memory_space<vmem>>, %arg7: memref<1x128x128xf32, #tpu.memory_space<vmem>>, %arg8: memref<128x128xf32, #tpu.memory_space<vmem>>) attributes {dimension_semantics = [#tpu.dimension_semantics<parallel>, #tpu.dimension_semantics<arbitrary>], iteration_bounds = array<i64: 2, 1>, scalar_prefetch = 0 : i64, scratch_operands = 1 : i64, tpu.core_type = #tpu.core_type<tc>, window_params = [{transform_indices = @transform_0, window_bounds = array<i64: 1, 128, 128>}, {transform_indices = @transform_1, window_bounds = array<i64: 1, 128, 96>}, {transform_indices = @transform_2, window_bounds = array<i64: 1, 1, 96>}, {transform_indices = @transform_3, window_bounds = array<i64: 1, 32, 128>}, {pipeline_mode = #tpu.pipeline_mode<synchronous>, transform_indices = @transform_4, window_bounds = array<i64: 1, 128>}, {transform_indices = @transform_5, window_bounds = array<i64: 1, 128, 128>}]} {
    %c0_i32 = arith.constant 0 : i32
    %0 = arith.cmpi eq, %arg1, %c0_i32 : i32
    %1 = arith.extui %0 : i1 to i32
    %c0_i32_0 = arith.constant 0 : i32
    %2 = arith.cmpi ne, %1, %c0_i32_0 : i32
    scf.if %2 {
      %cst_39 = arith.constant 0.000000e+00 : f32
      %117 = vector.broadcast %cst_39 : f32 to vector<128x128xf32>
      %c0_40 = arith.constant 0 : index
      %c0_41 = arith.constant 0 : index
      %118 = vector.load %arg8[%c0_40, %c0_41] : memref<128x128xf32, #tpu.memory_space<vmem>>, vector<128x128xf32>
      tpu.vector_store %arg8[%c0_40, %c0_41], %117 {strides = array<i32>} : memref<128x128xf32, #tpu.memory_space<vmem>>, vector<128x128xf32>,
    } else {
    }
    %c0 = arith.constant 0 : index
    %c0_1 = arith.constant 0 : index
    %c0_2 = arith.constant 0 : index
    %3 = vector.load %arg2[%c0, %c0_1, %c0_2] : memref<1x128x128xbf16, #tpu.memory_space<vmem>>, vector<1x128x128xbf16>
    %4 = vector.shape_cast %3 : vector<1x128x128xbf16> to vector<128x128xbf16>
    %c0_3 = arith.constant 0 : index
    %c0_4 = arith.constant 0 : index
    %c0_5 = arith.constant 0 : index
    %5 = vector.load %arg3[%c0_3, %c0_4, %c0_5] : memref<1x128x96xbf16, #tpu.memory_space<vmem>>, vector<1x128x96xbf16>
    %6 = vector.shape_cast %5 : vector<1x128x96xbf16> to vector<128x96xbf16>
    %cst = arith.constant dense<0.000000e+00> : vector<128x96xf32>
    %7 = tpu.matmul %4, %6, %cst {dimension_numbers = #tpu.dot_dimension_numbers<[1], [0], [0], [1], [0, 0, 1, 1], [], []>} : vector<128x128xbf16>, vector<128x96xbf16>, vector<128x96xf32> -> vector<128x96xf32>
    %c0_6 = arith.constant 0 : index
    %c0_7 = arith.constant 0 : index
    %c0_8 = arith.constant 0 : index
    %8 = vector.load %arg4[%c0_6, %c0_7, %c0_8] : memref<1x1x96xf32, #tpu.memory_space<vmem>>, vector<1x1x96xf32>
    %9 = vector.shape_cast %8 : vector<1x1x96xf32> to vector<1x96xf32>
    %10 = vector.broadcast %9 : vector<1x96xf32> to vector<128x96xf32>
    %11 = arith.addf %7, %10 : vector<128x96xf32>
    %12 = tpu.iota {dimensions = array<i32: 1>} : vector<128x128xi32>
    %c8_i32 = arith.constant 8 : i32
    %13 = vector.broadcast %c8_i32 : i32 to vector<128x128xi32>
    %14 = arith.cmpi slt, %12, %13 : vector<128x128xi32>
    %15 = vector.extract_strided_slice %11 {offsets = [0, 0], sizes = [128, 8], strides = [1, 1]} : vector<128x96xf32> to vector<128x8xf32>
    %16 = vector.extract_strided_slice %11 {offsets = [0, 32], sizes = [128, 8], strides = [1, 1]} : vector<128x96xf32> to vector<128x8xf32>
    %17 = vector.extract_strided_slice %11 {offsets = [0, 64], sizes = [128, 8], strides = [1, 1]} : vector<128x96xf32> to vector<128x8xf32>
    %18 = arith.truncf %15 : vector<128x8xf32> to vector<128x8xbf16>
    %19 = arith.truncf %16 : vector<128x8xf32> to vector<128x8xbf16>
    %cst_9 = arith.constant dense<0.000000e+00> : vector<128x128xf32>
    %20 = tpu.matmul %18, %19, %cst_9 {dimension_numbers = #tpu.dot_dimension_numbers<[1], [1], [0], [0], [0, 0, 1, 0], [], []>} : vector<128x8xbf16>, vector<128x8xbf16>, vector<128x128xf32> -> vector<128x128xf32>
    %cst_10 = arith.constant -1.000000e+30 : f32
    %21 = vector.broadcast %cst_10 : f32 to vector<128x128xf32>
    %22 = arith.select %14, %20, %21 : vector<128x128xi1>, vector<128x128xf32>
    %cst_11 = arith.constant dense<0xFF800000> : vector<128xf32>
    %23 = vector.multi_reduction <maximumf>, %22, %cst_11 [1] : vector<128x128xf32> to vector<128xf32>
    %24 = vector.shape_cast %23 : vector<128xf32> to vector<128x1xf32>
    %25 = vector.broadcast %24 : vector<128x1xf32> to vector<128x128xf32>
    %26 = arith.subf %22, %25 : vector<128x128xf32>
    %27 = math.exp %26 : vector<128x128xf32>
    %28 = arith.truncf %27 : vector<128x128xf32> to vector<128x128xbf16>
    %29 = arith.extf %28 : vector<128x128xbf16> to vector<128x128xf32>
    %cst_12 = arith.constant dense<0.000000e+00> : vector<128xf32>
    %30 = vector.multi_reduction <add>, %29, %cst_12 [1] : vector<128x128xf32> to vector<128xf32>
    %31 = vector.shape_cast %30 : vector<128xf32> to vector<128x1xf32>
    %32 = arith.truncf %17 : vector<128x8xf32> to vector<128x8xbf16>
    %cst_13 = arith.constant dense<0.000000e+00> : vector<128x8xf32>
    %33 = tpu.matmul %28, %32, %cst_13 {dimension_numbers = #tpu.dot_dimension_numbers<[1], [0], [0], [1], [0, 0, 1, 1], [], []>} : vector<128x128xbf16>, vector<128x8xbf16>, vector<128x8xf32> -> vector<128x8xf32>
    %34 = tpu.reciprocal %31 {approx = true} : vector<128x1xf32> -> vector<128x1xf32>
    %35 = vector.broadcast %34 : vector<128x1xf32> to vector<128x8xf32>
    %36 = arith.mulf %33, %35 : vector<128x8xf32>
    %37 = arith.truncf %36 : vector<128x8xf32> to vector<128x8xbf16>
    %38 = vector.extract_strided_slice %11 {offsets = [0, 8], sizes = [128, 8], strides = [1, 1]} : vector<128x96xf32> to vector<128x8xf32>
    %39 = vector.extract_strided_slice %11 {offsets = [0, 40], sizes = [128, 8], strides = [1, 1]} : vector<128x96xf32> to vector<128x8xf32>
    %40 = vector.extract_strided_slice %11 {offsets = [0, 72], sizes = [128, 8], strides = [1, 1]} : vector<128x96xf32> to vector<128x8xf32>
    %41 = arith.truncf %38 : vector<128x8xf32> to vector<128x8xbf16>
    %42 = arith.truncf %39 : vector<128x8xf32> to vector<128x8xbf16>
    %cst_14 = arith.constant dense<0.000000e+00> : vector<128x128xf32>
    %43 = tpu.matmul %41, %42, %cst_14 {dimension_numbers = #tpu.dot_dimension_numbers<[1], [1], [0], [0], [0, 0, 1, 0], [], []>} : vector<128x8xbf16>, vector<128x8xbf16>, vector<128x128xf32> -> vector<128x128xf32>
    %cst_15 = arith.constant -1.000000e+30 : f32
    %44 = vector.broadcast %cst_15 : f32 to vector<128x128xf32>
    %45 = arith.select %14, %43, %44 : vector<128x128xi1>, vector<128x128xf32>
    %cst_16 = arith.constant dense<0xFF800000> : vector<128xf32>
    %46 = vector.multi_reduction <maximumf>, %45, %cst_16 [1] : vector<128x128xf32> to vector<128xf32>
    %47 = vector.shape_cast %46 : vector<128xf32> to vector<128x1xf32>
    %48 = vector.broadcast %47 : vector<128x1xf32> to vector<128x128xf32>
    %49 = arith.subf %45, %48 : vector<128x128xf32>
    %50 = math.exp %49 : vector<128x128xf32>
    %51 = arith.truncf %50 : vector<128x128xf32> to vector<128x128xbf16>
    %52 = arith.extf %51 : vector<128x128xbf16> to vector<128x128xf32>
    %cst_17 = arith.constant dense<0.000000e+00> : vector<128xf32>
    %53 = vector.multi_reduction <add>, %52, %cst_17 [1] : vector<128x128xf32> to vector<128xf32>
    %54 = vector.shape_cast %53 : vector<128xf32> to vector<128x1xf32>
    %55 = arith.truncf %40 : vector<128x8xf32> to vector<128x8xbf16>
    %cst_18 = arith.constant dense<0.000000e+00> : vector<128x8xf32>
    %56 = tpu.matmul %51, %55, %cst_18 {dimension_numbers = #tpu.dot_dimension_numbers<[1], [0], [0], [1], [0, 0, 1, 1], [], []>} : vector<128x128xbf16>, vector<128x8xbf16>, vector<128x8xf32> -> vector<128x8xf32>
    %57 = tpu.reciprocal %54 {approx = true} : vector<128x1xf32> -> vector<128x1xf32>
    %58 = vector.broadcast %57 : vector<128x1xf32> to vector<128x8xf32>
    %59 = arith.mulf %56, %58 : vector<128x8xf32>
    %60 = arith.truncf %59 : vector<128x8xf32> to vector<128x8xbf16>
    %61 = vector.extract_strided_slice %11 {offsets = [0, 16], sizes = [128, 8], strides = [1, 1]} : vector<128x96xf32> to vector<128x8xf32>
    %62 = vector.extract_strided_slice %11 {offsets = [0, 48], sizes = [128, 8], strides = [1, 1]} : vector<128x96xf32> to vector<128x8xf32>
    %63 = vector.extract_strided_slice %11 {offsets = [0, 80], sizes = [128, 8], strides = [1, 1]} : vector<128x96xf32> to vector<128x8xf32>
    %64 = arith.truncf %61 : vector<128x8xf32> to vector<128x8xbf16>
    %65 = arith.truncf %62 : vector<128x8xf32> to vector<128x8xbf16>
    %cst_19 = arith.constant dense<0.000000e+00> : vector<128x128xf32>
    %66 = tpu.matmul %64, %65, %cst_19 {dimension_numbers = #tpu.dot_dimension_numbers<[1], [1], [0], [0], [0, 0, 1, 0], [], []>} : vector<128x8xbf16>, vector<128x8xbf16>, vector<128x128xf32> -> vector<128x128xf32>
    %cst_20 = arith.constant -1.000000e+30 : f32
    %67 = vector.broadcast %cst_20 : f32 to vector<128x128xf32>
    %68 = arith.select %14, %66, %67 : vector<128x128xi1>, vector<128x128xf32>
    %cst_21 = arith.constant dense<0xFF800000> : vector<128xf32>
    %69 = vector.multi_reduction <maximumf>, %68, %cst_21 [1] : vector<128x128xf32> to vector<128xf32>
    %70 = vector.shape_cast %69 : vector<128xf32> to vector<128x1xf32>
    %71 = vector.broadcast %70 : vector<128x1xf32> to vector<128x128xf32>
    %72 = arith.subf %68, %71 : vector<128x128xf32>
    %73 = math.exp %72 : vector<128x128xf32>
    %74 = arith.truncf %73 : vector<128x128xf32> to vector<128x128xbf16>
    %75 = arith.extf %74 : vector<128x128xbf16> to vector<128x128xf32>
    %cst_22 = arith.constant dense<0.000000e+00> : vector<128xf32>
    %76 = vector.multi_reduction <add>, %75, %cst_22 [1] : vector<128x128xf32> to vector<128xf32>
    %77 = vector.shape_cast %76 : vector<128xf32> to vector<128x1xf32>
    %78 = arith.truncf %63 : vector<128x8xf32> to vector<128x8xbf16>
    %cst_23 = arith.constant dense<0.000000e+00> : vector<128x8xf32>
    %79 = tpu.matmul %74, %78, %cst_23 {dimension_numbers = #tpu.dot_dimension_numbers<[1], [0], [0], [1], [0, 0, 1, 1], [], []>} : vector<128x128xbf16>, vector<128x8xbf16>, vector<128x8xf32> -> vector<128x8xf32>
    %80 = tpu.reciprocal %77 {approx = true} : vector<128x1xf32> -> vector<128x1xf32>
    %81 = vector.broadcast %80 : vector<128x1xf32> to vector<128x8xf32>
    %82 = arith.mulf %79, %81 : vector<128x8xf32>
    %83 = arith.truncf %82 : vector<128x8xf32> to vector<128x8xbf16>
    %84 = vector.extract_strided_slice %11 {offsets = [0, 24], sizes = [128, 8], strides = [1, 1]} : vector<128x96xf32> to vector<128x8xf32>
    %85 = vector.extract_strided_slice %11 {offsets = [0, 56], sizes = [128, 8], strides = [1, 1]} : vector<128x96xf32> to vector<128x8xf32>
    %86 = vector.extract_strided_slice %11 {offsets = [0, 88], sizes = [128, 8], strides = [1, 1]} : vector<128x96xf32> to vector<128x8xf32>
    %87 = arith.truncf %84 : vector<128x8xf32> to vector<128x8xbf16>
    %88 = arith.truncf %85 : vector<128x8xf32> to vector<128x8xbf16>
    %cst_24 = arith.constant dense<0.000000e+00> : vector<128x128xf32>
    %89 = tpu.matmul %87, %88, %cst_24 {dimension_numbers = #tpu.dot_dimension_numbers<[1], [1], [0], [0], [0, 0, 1, 0], [], []>} : vector<128x8xbf16>, vector<128x8xbf16>, vector<128x128xf32> -> vector<128x128xf32>
    %cst_25 = arith.constant -1.000000e+30 : f32
    %90 = vector.broadcast %cst_25 : f32 to vector<128x128xf32>
    %91 = arith.select %14, %89, %90 : vector<128x128xi1>, vector<128x128xf32>
    %cst_26 = arith.constant dense<0xFF800000> : vector<128xf32>
    %92 = vector.multi_reduction <maximumf>, %91, %cst_26 [1] : vector<128x128xf32> to vector<128xf32>
    %93 = vector.shape_cast %92 : vector<128xf32> to vector<128x1xf32>
    %94 = vector.broadcast %93 : vector<128x1xf32> to vector<128x128xf32>
    %95 = arith.subf %91, %94 : vector<128x128xf32>
    %96 = math.exp %95 : vector<128x128xf32>
    %97 = arith.truncf %96 : vector<128x128xf32> to vector<128x128xbf16>
    %98 = arith.extf %97 : vector<128x128xbf16> to vector<128x128xf32>
    %cst_27 = arith.constant dense<0.000000e+00> : vector<128xf32>
    %99 = vector.multi_reduction <add>, %98, %cst_27 [1] : vector<128x128xf32> to vector<128xf32>
    %100 = vector.shape_cast %99 : vector<128xf32> to vector<128x1xf32>
    %101 = arith.truncf %86 : vector<128x8xf32> to vector<128x8xbf16>
    %cst_28 = arith.constant dense<0.000000e+00> : vector<128x8xf32>
    %102 = tpu.matmul %97, %101, %cst_28 {dimension_numbers = #tpu.dot_dimension_numbers<[1], [0], [0], [1], [0, 0, 1, 1], [], []>} : vector<128x128xbf16>, vector<128x8xbf16>, vector<128x8xf32> -> vector<128x8xf32>
    %103 = tpu.reciprocal %100 {approx = true} : vector<128x1xf32> -> vector<128x1xf32>
    %104 = vector.broadcast %103 : vector<128x1xf32> to vector<128x8xf32>
    %105 = arith.mulf %102, %104 : vector<128x8xf32>
    %106 = arith.truncf %105 : vector<128x8xf32> to vector<128x8xbf16>
    %107 = tpu.concatenate %37, %60, %83, %106 in 1 : vector<128x8xbf16>, vector<128x8xbf16>, vector<128x8xbf16>, vector<128x8xbf16> -> vector<128x32xbf16>
    %c0_29 = arith.constant 0 : index
    %c0_30 = arith.constant 0 : index
    %108 = vector.load %arg8[%c0_29, %c0_30] : memref<128x128xf32, #tpu.memory_space<vmem>>, vector<128x128xf32>
    %c0_31 = arith.constant 0 : index
    %c0_32 = arith.constant 0 : index
    %c0_33 = arith.constant 0 : index
    %109 = vector.load %arg5[%c0_31, %c0_32, %c0_33] : memref<1x32x128xbf16, #tpu.memory_space<vmem>>, vector<1x32x128xbf16>
    %110 = vector.shape_cast %109 : vector<1x32x128xbf16> to vector<32x128xbf16>
    %cst_34 = arith.constant dense<0.000000e+00> : vector<128x128xf32>
    %111 = tpu.matmul %107, %110, %cst_34 {dimension_numbers = #tpu.dot_dimension_numbers<[1], [0], [0], [1], [0, 0, 1, 1], [], []>} : vector<128x32xbf16>, vector<32x128xbf16>, vector<128x128xf32> -> vector<128x128xf32>
    %112 = arith.addf %108, %111 : vector<128x128xf32>
    %c0_35 = arith.constant 0 : index
    %c0_36 = arith.constant 0 : index
    %113 = vector.load %arg8[%c0_35, %c0_36] : memref<128x128xf32, #tpu.memory_space<vmem>>, vector<128x128xf32>
    tpu.vector_store %arg8[%c0_35, %c0_36], %112 {strides = array<i32>} : memref<128x128xf32, #tpu.memory_space<vmem>>, vector<128x128xf32>,
    %c0_i32_37 = arith.constant 0 : i32
    %114 = arith.cmpi eq, %arg1, %c0_i32_37 : i32
    %115 = arith.extui %114 : i1 to i32
    %c0_i32_38 = arith.constant 0 : i32
    %116 = arith.cmpi ne, %115, %c0_i32_38 : i32
    scf.if %116 {
      %c0_39 = arith.constant 0 : index
      %c0_40 = arith.constant 0 : index
      %117 = vector.load %arg8[%c0_39, %c0_40] : memref<128x128xf32, #tpu.memory_space<vmem>>, vector<128x128xf32>
      %c0_41 = arith.constant 0 : index
      %c0_42 = arith.constant 0 : index
      %118 = vector.load %arg6[%c0_41, %c0_42] : memref<1x128xf32, #tpu.memory_space<vmem>>, vector<1x128xf32>
      %119 = vector.broadcast %118 : vector<1x128xf32> to vector<128x128xf32>
      %120 = arith.addf %117, %119 : vector<128x128xf32>
      %c0_43 = arith.constant 0 : index
      %c0_44 = arith.constant 0 : index
      %c0_45 = arith.constant 0 : index
      %121 = vector.load %arg7[%c0_43, %c0_44, %c0_45] : memref<1x128x128xf32, #tpu.memory_space<vmem>>, vector<1x128x128xf32>
      %122 = vector.shape_cast %121 : vector<1x128x128xf32> to vector<128x128xf32>
      %123 = vector.shape_cast %120 : vector<128x128xf32> to vector<1x128x128xf32>
      tpu.vector_store %arg7[%c0_43, %c0_44, %c0_45], %123 {strides = array<i32>} : memref<1x128x128xf32, #tpu.memory_space<vmem>>, vector<1x128x128xf32>,
    } else {
    }
    return
  }
  func.func @transform_0(%arg0: i32, %arg1: i32) -> (i32, i32, i32) {
    %c0_i32 = arith.constant 0 : i32
    %c0_i32_0 = arith.constant 0 : i32
    %c0_i32_1 = arith.constant 0 : i32
    return %arg0, %c0_i32, %c0_i32_0 : i32, i32, i32
  }
  func.func @transform_1(%arg0: i32, %arg1: i32) -> (i32, i32, i32) {
    %c0_i32 = arith.constant 0 : i32
    %c0_i32_0 = arith.constant 0 : i32
    %c0_i32_1 = arith.constant 0 : i32
    return %arg1, %c0_i32, %c0_i32_0 : i32, i32, i32
  }
  func.func @transform_2(%arg0: i32, %arg1: i32) -> (i32, i32, i32) {
    %c0_i32 = arith.constant 0 : i32
    %c0_i32_0 = arith.constant 0 : i32
    %c0_i32_1 = arith.constant 0 : i32
    return %arg1, %c0_i32, %c0_i32_0 : i32, i32, i32
  }
  func.func @transform_3(%arg0: i32, %arg1: i32) -> (i32, i32, i32) {
    %c0_i32 = arith.constant 0 : i32
    %c0_i32_0 = arith.constant 0 : i32
    %c0_i32_1 = arith.constant 0 : i32
    return %arg1, %c0_i32, %c0_i32_0 : i32, i32, i32
  }
  func.func @transform_4(%arg0: i32, %arg1: i32) -> (i32, i32) {
    %c0_i32 = arith.constant 0 : i32
    %c0_i32_0 = arith.constant 0 : i32
    %c0_i32_1 = arith.constant 0 : i32
    return %c0_i32, %c0_i32_0 : i32, i32
  }
  func.func @transform_5(%arg0: i32, %arg1: i32) -> (i32, i32, i32) {
    %c0_i32 = arith.constant 0 : i32
    %c0_i32_0 = arith.constant 0 : i32
    %c0_i32_1 = arith.constant 0 : i32
    return %arg0, %c0_i32, %c0_i32_0 : i32, i32, i32
  }
}

</mosaic_0001>

<llo_original>
// kernel: tpu_custom_call.1
$region0: #{tpu_custom_call.1}
  #allocation0 [shape = 'u32[]', space=smem, size = 0x4, offset = 0x4, fixed_abs, tag = 'smem constant byte address 0x4 - core index']
  #allocation1 [shape = 'u32[72,128]{1,0:T(1,128)}', space=vmem, size = 0x9000, scoped, tag = 'internal scratch']
  #allocation2 [shape = 'f32[128,128]{1,0:T(8,128)}', space=vmem, size = 0x10000, scoped, tag = 'scratch operand']
  %s0 = inlined_call_operand.hbm [shape: bf16[2,128,128], index: 0, kind: input, shape index: {}]
  %s1 = inlined_call_operand.vmem [shape: bf16[1,128,96], index: 1, kind: input, shape index: {}]
  %s2 = inlined_call_operand.vmem [shape: f32[1,1,96], index: 2, kind: input, shape index: {}]
  %s3 = inlined_call_operand.vmem [shape: bf16[1,32,128], index: 3, kind: input, shape index: {}]
  %s4 = inlined_call_operand.vmem [shape: f32[1,128], index: 4, kind: input, shape index: {}]
  %s5 = inlined_call_operand.hbm [shape: f32[2,128,128], index: 5, kind: output, shape index: {}]
  %s6 = sld [smem:[#allocation0]]
  $region65: #{tpu_custom_call.1} parent=0
    _
  %s8 = ssub.s32 1, %s6
  %s9 = scalar_select 0, %s8, %s6
  $region1: #{tpu_custom_call.1} parent=0
    #allocation3 [shape = 'u8[65536]{0}', space=vmem, size = 0x10000, scoped, tag = 'input window, operand 0']
    #allocation4 [shape = 's32[2]{0}', space=sflag, size = 0x8, scoped, tag = 'scoped memory for tpu_custom_call.1']
    #allocation5 [shape = 's32[2]{0}', space=sflag, size = 0x8, scoped, tag = 'scoped memory for tpu_custom_call.1']
    #allocation6 [shape = 'u8[131072]{0}', space=vmem, size = 0x20000, scoped, tag = 'output window, operand 0']
    %10 = vsyncpa [#allocation4], 0
    %s11 = scalar_lea.sflag [#allocation4], 1
    %12 = vsyncpa %s11, 0
    %13 = vsyncpa [#allocation5], 0
    %s14 = scalar_lea.sflag [#allocation5], 1
    %15 = vsyncpa %s14, 0
    loop: start=0, step=1, limit=4
    $region2: #{tpu_custom_call.1} parent=1 // loop_pre_header
      _
    $region3: #{tpu_custom_call.1} parent=1 // loop_header
      %s17 = sphi 0, %s21
      %p18 = scmp.ge.s32.totalorder %s17, 4
      %s24 = sphi 0, %s36
      %s25 = sphi 0, %s32
      %s26 = sphi 0, %s24
      %s27 = sphi 0, %s25
      %s28 = sphi 0, %s26
      %s29 = sphi 0, %s27
      %s39 = sphi 0, %s41
      %s42 = sphi 0, %s39
      %s43 = sphi 0, %s42
      %s59 = sphi 0, %s43
      %s65 = sphi 0, %s67
      %s68 = sphi 0, %s65
      %s69 = sphi 0, %s68
      %s85 = sphi 0, %s69
      %s91 = sphi 0, %s93
      %s94 = sphi 0, %s91
      %s95 = sphi 0, %s94
      %s111 = sphi 0, %s95
      %s117 = sphi 0, %s119
      %s120 = sphi 0, %s117
      %s121 = sphi 0, %s120
      %s137 = sphi 0, %s121
      %s141 = sphi 0, %s141
      %s143 = sphi 0, %s141
      %s144 = sphi 0, %s143
      %s158 = sphi 0, %s144
      %s164 = sphi 0, %s166
      %s167 = sphi 0, %s164
      %s168 = sphi 0, %s167
      %s184 = sphi 0, %s168
    $region4: #{tpu_custom_call.1} parent=1 // loop_header_branch
      %20 = sbr.rel (%p18) target = $region8
    $region5: #{tpu_custom_call.1} parent=1 // loop_body
      %s22 = ssub.s32 %s17, 1
      %s23 = ssub.s32 %s17, 2
      %s30 = sadd.s32 1, %s25
      %p31 = scmp.ge.s32.totalorder %s30, 1
      %s32 = scalar_select %p31, 0, %s30
      %s33 = sadd.s32 1, %s24
      %s34 = scalar_select %p31, %s33, %s24
      %p35 = scmp.ge.s32.totalorder %s34, 2
      %s36 = scalar_select %p35, 0, %s34
      %s37 = ssub.s32 %s24, %s36
      %p38 = scmp.eq.s32.totalorder %s37, 0
      %s40 = sadd.s32 %s39, 1
      %s41 = scalar_select %p38, %s39, %s40
      %p44 = pneg %p38
      %p45 = scmp.eq.s32.totalorder %s17, 1
      %p46 = por %p44, %p45
      %p47 = scmp.ne.s32.totalorder %s39, %s42
      %p48 = scmp.eq.s32.totalorder %s17, 0
      %p49 = por %p47, %p48
      %p50 = scmp.ne.s32.totalorder %s39, %s42
      %p51 = scmp.eq.s32.totalorder %s22, 1
      %p52 = por %p50, %p51
      %p53 = scmp.ne.s32.totalorder %s42, %s43
      %p54 = scmp.eq.s32.totalorder %s22, 0
      %p55 = por %p53, %p54
      %p56 = scmp.ne.s32.totalorder %s42, %s43
      %p57 = scmp.eq.s32.totalorder %s23, 1
      %p58 = por %p56, %p57
      %p60 = scmp.ne.s32.totalorder %s43, %s59
      %p61 = scmp.eq.s32.totalorder %s23, 0
      %p62 = por %p60, %p61
      %s63 = ssub.s32 %s25, %s32
      %p64 = scmp.eq.s32.totalorder %s63, 0
      %s66 = sadd.s32 %s65, 1
      %s67 = scalar_select %p64, %s65, %s66
      %p70 = pneg %p64
      %p71 = scmp.eq.s32.totalorder %s17, 1
      %p72 = por %p70, %p71
      %p73 = scmp.ne.s32.totalorder %s65, %s68
      %p74 = scmp.eq.s32.totalorder %s17, 0
      %p75 = por %p73, %p74
      %p76 = scmp.ne.s32.totalorder %s65, %s68
      %p77 = scmp.eq.s32.totalorder %s22, 1
      %p78 = por %p76, %p77
      %p79 = scmp.ne.s32.totalorder %s68, %s69
      %p80 = scmp.eq.s32.totalorder %s22, 0
      %p81 = por %p79, %p80
      %p82 = scmp.ne.s32.totalorder %s68, %s69
      %p83 = scmp.eq.s32.totalorder %s23, 1
      %p84 = por %p82, %p83
      %p86 = scmp.ne.s32.totalorder %s69, %s85
      %p87 = scmp.eq.s32.totalorder %s23, 0
      %p88 = por %p86, %p87
      %s89 = ssub.s32 %s25, %s32
      %p90 = scmp.eq.s32.totalorder %s89, 0
      %s92 = sadd.s32 %s91, 1
      %s93 = scalar_select %p90, %s91, %s92
      %p96 = pneg %p90
      %p97 = scmp.eq.s32.totalorder %s17, 1
      %p98 = por %p96, %p97
      %p99 = scmp.ne.s32.totalorder %s91, %s94
      %p100 = scmp.eq.s32.totalorder %s17, 0
      %p101 = por %p99, %p100
      %p102 = scmp.ne.s32.totalorder %s91, %s94
      %p103 = scmp.eq.s32.totalorder %s22, 1
      %p104 = por %p102, %p103
      %p105 = scmp.ne.s32.totalorder %s94, %s95
      %p106 = scmp.eq.s32.totalorder %s22, 0
      %p107 = por %p105, %p106
      %p108 = scmp.ne.s32.totalorder %s94, %s95
      %p109 = scmp.eq.s32.totalorder %s23, 1
      %p110 = por %p108, %p109
      %p112 = scmp.ne.s32.totalorder %s95, %s111
      %p113 = scmp.eq.s32.totalorder %s23, 0
      %p114 = por %p112, %p113
      %s115 = ssub.s32 %s25, %s32
      %p116 = scmp.eq.s32.totalorder %s115, 0
      %s118 = sadd.s32 %s117, 1
      %s119 = scalar_select %p116, %s117, %s118
      %p122 = pneg %p116
      %p123 = scmp.eq.s32.totalorder %s17, 1
      %p124 = por %p122, %p123
      %p125 = scmp.ne.s32.totalorder %s117, %s120
      %p126 = scmp.eq.s32.totalorder %s17, 0
      %p127 = por %p125, %p126
      %p128 = scmp.ne.s32.totalorder %s117, %s120
      %p129 = scmp.eq.s32.totalorder %s22, 1
      %p130 = por %p128, %p129
      %p131 = scmp.ne.s32.totalorder %s120, %s121
      %p132 = scmp.eq.s32.totalorder %s22, 0
      %p133 = por %p131, %p132
      %p134 = scmp.ne.s32.totalorder %s120, %s121
      %p135 = scmp.eq.s32.totalorder %s23, 1
      %p136 = por %p134, %p135
      %p138 = scmp.ne.s32.totalorder %s121, %s137
      %p139 = scmp.eq.s32.totalorder %s23, 0
      %p140 = por %p138, %p139
      %s142 = sadd.s32 %s141, 1
      %p145 = scmp.eq.s32.totalorder %s17, 1
      %p146 = scmp.ne.s32.totalorder %s141, %s143
      %p147 = scmp.eq.s32.totalorder %s17, 0
      %p148 = por %p146, %p147
      %p149 = scmp.ne.s32.totalorder %s141, %s143
      %p150 = scmp.eq.s32.totalorder %s22, 1
      %p151 = por %p149, %p150
      %p152 = scmp.ne.s32.totalorder %s143, %s144
      %p153 = scmp.eq.s32.totalorder %s22, 0
      %p154 = por %p152, %p153
      %p155 = scmp.ne.s32.totalorder %s143, %s144
      %p156 = scmp.eq.s32.totalorder %s23, 1
      %p157 = por %p155, %p156
      %p159 = scmp.ne.s32.totalorder %s144, %s158
      %p160 = scmp.eq.s32.totalorder %s23, 0
      %p161 = por %p159, %p160
      %s162 = ssub.s32 %s24, %s36
      %p163 = scmp.eq.s32.totalorder %s162, 0
      %s165 = sadd.s32 %s164, 1
      %s166 = scalar_select %p163, %s164, %s165
      %p169 = pneg %p163
      %p170 = scmp.eq.s32.totalorder %s17, 1
      %p171 = por %p169, %p170
      %p172 = scmp.ne.s32.totalorder %s164, %s167
      %p173 = scmp.eq.s32.totalorder %s17, 0
      %p174 = por %p172, %p173
      %p175 = scmp.ne.s32.totalorder %s164, %s167
      %p176 = scmp.eq.s32.totalorder %s22, 1
      %p177 = por %p175, %p176
      %p178 = scmp.ne.s32.totalorder %s167, %s168
      %p179 = scmp.eq.s32.totalorder %s22, 0
      %p180 = por %p178, %p179
      %p181 = scmp.ne.s32.totalorder %s167, %s168
      %p182 = scmp.eq.s32.totalorder %s23, 1
      %p183 = por %p181, %p182
      %p185 = scmp.ne.s32.totalorder %s168, %s184
      %p186 = scmp.eq.s32.totalorder %s23, 0
      %p187 = por %p185, %p186
      %p188 = scmp.le.s32.totalorder 1, %s17
      %p189 = scmp.lt.s32.totalorder %s17, 3
      %p190 = pnand %p188, %p189
      %p191 = pneg %p190
      // Predicated region
      $region9: #{tpu_custom_call.1} parent=5 // pred_check
        _
      $region10: #{tpu_custom_call.1} parent=5 // pred_check_branch
        %193 = sbr.rel (%p190) target = $region12
      $region11: #{tpu_custom_call.1} parent=5 // pred_region
        %s194 = ssub.s32 %s17, 1
        // Predicated region
        $region13: #{tpu_custom_call.1} parent=11 // pred_check
          %p195 = pneg %p81
        $region14: #{tpu_custom_call.1} parent=11 // pred_check_branch
          %197 = sbr.rel (%p195) target = $region16
        $region15: #{tpu_custom_call.1} parent=11 // pred_region
          %p198 = scmp.lt.s32.totalorder %s27, 0
          %s199 = scalar_select %p198, %s27, 0
          %s200 = smul.addr %s199, 16
          %s201 = smul.addr %s200, 4
          %s202 = scalar_lea.vmem %s1, %s201
        $region16: #{tpu_custom_call.1} parent=11 // pred_fallthru
          _
        // Predicated region
        $region17: #{tpu_custom_call.1} parent=11 // pred_check
          %p203 = pneg %p107
        $region18: #{tpu_custom_call.1} parent=11 // pred_check_branch
          %205 = sbr.rel (%p203) target = $region20
        $region19: #{tpu_custom_call.1} parent=11 // pred_region
          %p206 = scmp.lt.s32.totalorder %s27, 0
          %s207 = scalar_select %p206, %s27, 0
          %s208 = scalar_lea.vmem %s2, %s207
        $region20: #{tpu_custom_call.1} parent=11 // pred_fallthru
          _
        // Predicated region
        $region21: #{tpu_custom_call.1} parent=11 // pred_check
          %p209 = pneg %p133
        $region22: #{tpu_custom_call.1} parent=11 // pred_check_branch
          %211 = sbr.rel (%p209) target = $region24
        $region23: #{tpu_custom_call.1} parent=11 // pred_region
          %p212 = scmp.lt.s32.totalorder %s27, 0
          %s213 = scalar_select %p212, %s27, 0
          %s214 = smul.addr %s213, 4
          %s215 = smul.addr %s214, 4
          %s216 = scalar_lea.vmem %s3, %s215
        $region24: #{tpu_custom_call.1} parent=11 // pred_fallthru
          _
        // Predicated region
        $region25: #{tpu_custom_call.1} parent=11 // pred_check
          %p217 = pneg %p154
        $region26: #{tpu_custom_call.1} parent=11 // pred_check_branch
          %219 = sbr.rel (%p217) target = $region28
        $region27: #{tpu_custom_call.1} parent=11 // pred_region
          _
        $region28: #{tpu_custom_call.1} parent=11 // pred_fallthru
          _
      $region12: #{tpu_custom_call.1} parent=5 // pred_fallthru
        _
      %p220 = scmp.lt.s32.totalorder %s17, 2
      // Predicated region
      $region29: #{tpu_custom_call.1} parent=5 // pred_check
        %p221 = pneg %p220
      $region30: #{tpu_custom_call.1} parent=5 // pred_check_branch
        %223 = sbr.rel (%p221) target = $region32
      $region31: #{tpu_custom_call.1} parent=5 // pred_region
        // Predicated region
        $region33: #{tpu_custom_call.1} parent=31 // pred_check
          %p224 = pneg %p49
        $region34: #{tpu_custom_call.1} parent=31 // pred_check_branch
          %226 = sbr.rel (%p224) target = $region36
        $region35: #{tpu_custom_call.1} parent=31 // pred_region
          %s227 = sand.u32 %s39, 1
          %s228 = scalar_lea.sflag [#allocation4], %s227
          %s229 = sand.u32 %s39, 1
          %s230 = smul.addr %s229, 64
          %s231 = scalar_lea.vmem [#allocation3], %s230
          %233 = vsyncadd %s228, 0
          %s234 = smul.addr %s24, 16
          %s235 = smul.addr %s234, 4
          %s236 = scalar_lea.hbm %s0, %s235
          %s237 = sshll.u32 %s236, 4
          %s238 = int_to_ptr.hbm [resolvable:$true] %s237
          %s239 = sshll.u32 %s231, 4
          %s240 = int_to_ptr.vmem [resolvable:$true] %s239
          %245 = dma.hbm_to_vmem [thread:$0]  %s238, 1024, %s240, %s228, 64, 64, 4
        $region36: #{tpu_custom_call.1} parent=31 // pred_fallthru
          _
      $region32: #{tpu_custom_call.1} parent=5 // pred_fallthru
        _
      %p246 = scmp.le.s32.totalorder 1, %s17
      %p247 = scmp.lt.s32.totalorder %s17, 3
      %p248 = pnand %p246, %p247
      %p249 = pneg %p248
      // Predicated region
      $region37: #{tpu_custom_call.1} parent=5 // pred_check
        _
      $region38: #{tpu_custom_call.1} parent=5 // pred_check_branch
        %251 = sbr.rel (%p248) target = $region40
      $region39: #{tpu_custom_call.1} parent=5 // pred_region
        %s252 = ssub.s32 %s17, 1
        %s253 = sand.u32 %s42, 1
        %s254 = scalar_lea.sflag [#allocation4], %s253
        %s255 = sand.u32 %s42, 1
        %s256 = smul.addr %s255, 64
        %s257 = scalar_lea.vmem [#allocation3], %s256
        // Predicated region
        $region41: #{tpu_custom_call.1} parent=39 // pred_check
          %p258 = pneg %p55
        $region42: #{tpu_custom_call.1} parent=39 // pred_check_branch
          %260 = sbr.rel (%p258) target = $region44
        $region43: #{tpu_custom_call.1} parent=39 // pred_region
          %262 = dma.done %s254, 1024
        $region44: #{tpu_custom_call.1} parent=39 // pred_fallthru
          _
        %s263 = sand.u32 %s42, 1
        %s264 = scalar_lea.sflag [#allocation4], %s263
        %s265 = sand.u32 %s42, 1
        %s266 = smul.addr %s265, 64
        %s267 = scalar_lea.vmem [#allocation3], %s266
        %p268 = pneg %p55
        %p269 = pneg %p52
        %p270 = scmp.lt.s32.totalorder %s27, 0
        %s271 = scalar_select %p270, %s27, 0
        %s272 = smul.addr %s271, 16
        %s273 = smul.addr %s272, 4
        %s274 = scalar_lea.vmem %s1, %s273
        %p275 = pneg %p81
        %p276 = pneg %p78
        %p277 = scmp.lt.s32.totalorder %s27, 0
        %s278 = scalar_select %p277, %s27, 0
        %s279 = scalar_lea.vmem %s2, %s278
        %p280 = pneg %p107
        %p281 = pneg %p104
        %p282 = scmp.lt.s32.totalorder %s27, 0
        %s283 = scalar_select %p282, %s27, 0
        %s284 = smul.addr %s283, 4
        %s285 = smul.addr %s284, 4
        %s286 = scalar_lea.vmem %s3, %s285
        %p287 = pneg %p133
        %p288 = pneg %p130
        %p289 = pneg %p154
        %p290 = pneg %p151
        %p291 = pneg %p180
        %p292 = pneg %p177
        %s293 = sand.u32 %s167, 1
        %s294 = scalar_lea.sflag [#allocation5], %s293
        %s295 = sand.u32 %s167, 1
        %s296 = smul.addr %s295, 128
        %s297 = scalar_lea.vmem [#allocation6], %s296
        %p298 = scmp.lt.s32.totalorder %s27, 0
        %s299 = scalar_select %p298, %s27, 0
        %s300 = smul.addr %s299, 16
        %s301 = smul.addr %s300, 4
        %s302 = scalar_lea.vmem %s1, %s301
        %p303 = scmp.lt.s32.totalorder %s27, 0
        %s304 = scalar_select %p303, %s27, 0
        %s305 = scalar_lea.vmem %s2, %s304
        %p306 = scmp.lt.s32.totalorder %s27, 0
        %s307 = scalar_select %p306, %s27, 0
        %s308 = smul.addr %s307, 4
        %s309 = smul.addr %s308, 4
        %s310 = scalar_lea.vmem %s3, %s309
        %p312 = scmp.eq.s32.totalorder %s27, 0
        // Predicated region
        $region45: #{tpu_custom_call.1} parent=39 // pred_check
          %p313 = pneg %p312
        $region46: #{tpu_custom_call.1} parent=39 // pred_check_branch
          %315 = sbr.rel (%p313) target = $region48
        $region47: #{tpu_custom_call.1} parent=39 // pred_region
          %316 = vst [vmem:[#allocation2] sm:$0xff] 0.0
          %317 = vst [vmem:[#allocation2 + $0x8] sm:$0xff] 0.0
          %318 = vst [vmem:[#allocation2 + $0x10] sm:$0xff] 0.0
          %319 = vst [vmem:[#allocation2 + $0x18] sm:$0xff] 0.0
          %320 = vst [vmem:[#allocation2 + $0x20] sm:$0xff] 0.0
          %321 = vst [vmem:[#allocation2 + $0x28] sm:$0xff] 0.0
          %322 = vst [vmem:[#allocation2 + $0x30] sm:$0xff] 0.0
          %323 = vst [vmem:[#allocation2 + $0x38] sm:$0xff] 0.0
          %324 = vst [vmem:[#allocation2 + $0x40] sm:$0xff] 0.0
          %325 = vst [vmem:[#allocation2 + $0x48] sm:$0xff] 0.0
          %326 = vst [vmem:[#allocation2 + $0x50] sm:$0xff] 0.0
          %327 = vst [vmem:[#allocation2 + $0x58] sm:$0xff] 0.0
          %328 = vst [vmem:[#allocation2 + $0x60] sm:$0xff] 0.0
          %329 = vst [vmem:[#allocation2 + $0x68] sm:$0xff] 0.0
          %330 = vst [vmem:[#allocation2 + $0x70] sm:$0xff] 0.0
          %331 = vst [vmem:[#allocation2 + $0x78] sm:$0xff] 0.0
        $region48: #{tpu_custom_call.1} parent=39 // pred_fallthru
          _
        %v332 = vld [vmem:[%s257] sm:$0xf]
        %v333 = vld [vmem:[%s257 + $0x4] sm:$0xf]
        %v334 = vld [vmem:[%s257 + $0x8] sm:$0xf]
        %v335 = vld [vmem:[%s257 + $0xc] sm:$0xf]
        %v336 = vld [vmem:[%s257 + $0x10] sm:$0xf]
        %v337 = vld [vmem:[%s257 + $0x14] sm:$0xf]
        %v338 = vld [vmem:[%s257 + $0x18] sm:$0xf]
        %v339 = vld [vmem:[%s257 + $0x1c] sm:$0xf]
        %v340 = vld [vmem:[%s257 + $0x20] sm:$0xf]
        %v341 = vld [vmem:[%s257 + $0x24] sm:$0xf]
        %v342 = vld [vmem:[%s257 + $0x28] sm:$0xf]
        %v343 = vld [vmem:[%s257 + $0x2c] sm:$0xf]
        %v344 = vld [vmem:[%s257 + $0x30] sm:$0xf]
        %v345 = vld [vmem:[%s257 + $0x34] sm:$0xf]
        %v346 = vld [vmem:[%s257 + $0x38] sm:$0xf]
        %v347 = vld [vmem:[%s257 + $0x3c] sm:$0xf]
        %v348 = vld [vmem:[%s302] sm:$0xf]
        %v349 = vld [vmem:[%s302 + $0x4] sm:$0xf]
        %v350 = vld [vmem:[%s302 + $0x8] sm:$0xf]
        %v351 = vld [vmem:[%s302 + $0xc] sm:$0xf]
        %v352 = vld [vmem:[%s302 + $0x10] sm:$0xf]
        %v353 = vld [vmem:[%s302 + $0x14] sm:$0xf]
        %v354 = vld [vmem:[%s302 + $0x18] sm:$0xf]
        %v355 = vld [vmem:[%s302 + $0x1c] sm:$0xf]
        %v356 = vld [vmem:[%s302 + $0x20] sm:$0xf]
        %v357 = vld [vmem:[%s302 + $0x24] sm:$0xf]
        %v358 = vld [vmem:[%s302 + $0x28] sm:$0xf]
        %v359 = vld [vmem:[%s302 + $0x2c] sm:$0xf]
        %v360 = vld [vmem:[%s302 + $0x30] sm:$0xf]
        %v361 = vld [vmem:[%s302 + $0x34] sm:$0xf]
        %v362 = vld [vmem:[%s302 + $0x38] sm:$0xf]
        %v363 = vld [vmem:[%s302 + $0x3c] sm:$0xf]
        %v364 = vld [vmem:[%s305] sm:$0x1]
        %v366 = vperm.slane %v364, 0
        %v384 = vunpack.c.l.b16 %v332
        %v385 = vunpack.c.l.b16 %v333
        %v386 = vunpack.c.l.b16 %v334
        %v387 = vunpack.c.l.b16 %v335
        %v388 = vunpack.c.l.b16 %v336
        %v389 = vunpack.c.l.b16 %v337
        %v390 = vunpack.c.l.b16 %v338
        %v391 = vunpack.c.l.b16 %v339
        %v392 = vunpack.c.l.b16 %v340
        %v393 = vunpack.c.l.b16 %v341
        %v394 = vunpack.c.l.b16 %v342
        %v395 = vunpack.c.l.b16 %v343
        %v396 = vunpack.c.l.b16 %v344
        %v397 = vunpack.c.l.b16 %v345
        %v398 = vunpack.c.l.b16 %v346
        %v399 = vunpack.c.l.b16 %v347
        %v400 = vpack.c.b16 %v385, %v384
        %v401 = vpack.c.b16 %v387, %v386
        %v402 = vpack.c.b16 %v389, %v388
        %v403 = vpack.c.b16 %v391, %v390
        %v404 = vpack.c.b16 %v393, %v392
        %v405 = vpack.c.b16 %v395, %v394
        %v406 = vpack.c.b16 %v397, %v396
        %v407 = vpack.c.b16 %v399, %v398
        %v432 = vunpack.c.l.b16 %v348
        %v433 = vunpack.c.l.b16 %v349
        %v434 = vunpack.c.l.b16 %v350
        %v435 = vunpack.c.l.b16 %v351
        %v436 = vunpack.c.l.b16 %v352
        %v437 = vunpack.c.l.b16 %v353
        %v438 = vunpack.c.l.b16 %v354
        %v439 = vunpack.c.l.b16 %v355
        %v440 = vunpack.c.l.b16 %v356
        %v441 = vunpack.c.l.b16 %v357
        %v442 = vunpack.c.l.b16 %v358
        %v443 = vunpack.c.l.b16 %v359
        %v444 = vunpack.c.l.b16 %v360
        %v445 = vunpack.c.l.b16 %v361
        %v446 = vunpack.c.l.b16 %v362
        %v447 = vunpack.c.l.b16 %v363
        %v448 = vpack.c.b16 %v433, %v432
        %v449 = vpack.c.b16 %v435, %v434
        %v450 = vpack.c.b16 %v437, %v436
        %v451 = vpack.c.b16 %v439, %v438
        %v452 = vpack.c.b16 %v441, %v440
        %v453 = vpack.c.b16 %v443, %v442
        %v454 = vpack.c.b16 %v445, %v444
        %v455 = vpack.c.b16 %v447, %v446
        %464 = vmatpush.bf16.msra.mxu0 %v455
        %465 = vmatpush.bf16.msra.mxu0 %v454
        %466 = vmatpush.bf16.msra.mxu0 %v453
        %467 = vmatpush.bf16.msra.mxu0 %v452
        %468 = vmatpush.bf16.msra.mxu0 %v451
        %469 = vmatpush.bf16.msra.mxu0 %v450
        %470 = vmatpush.bf16.msra.mxu0 %v449
        %471 = vmatpush.bf16.msra.mxu0 %v448
        %472 = vmatmul.bf16.gmra.mxu0 %v400
        %v473 = vpop.f32.mrf.mxu0
        %v474 = vadd.f32 %v366, %v473
        %v475 = vpop.f32.mrf.mxu0
        %v476 = vadd.f32 %v366, %v475
        %477 = vmatmul.bf16.gmra.mxu0 %v401
        %v478 = vpop.f32.mrf.mxu0
        %v479 = vadd.f32 %v366, %v478
        %v480 = vpop.f32.mrf.mxu0
        %v481 = vadd.f32 %v366, %v480
        %482 = vmatmul.bf16.gmra.mxu0 %v402
        %v483 = vpop.f32.mrf.mxu0
        %v484 = vadd.f32 %v366, %v483
        %v485 = vpop.f32.mrf.mxu0
        %v486 = vadd.f32 %v366, %v485
        %487 = vmatmul.bf16.gmra.mxu0 %v403
        %v488 = vpop.f32.mrf.mxu0
        %v489 = vadd.f32 %v366, %v488
        %v490 = vpop.f32.mrf.mxu0
        %v491 = vadd.f32 %v366, %v490
        %492 = vmatmul.bf16.gmra.mxu0 %v404
        %v493 = vpop.f32.mrf.mxu0
        %v494 = vadd.f32 %v366, %v493
        %v495 = vpop.f32.mrf.mxu0
        %v496 = vadd.f32 %v366, %v495
        %497 = vmatmul.bf16.gmra.mxu0 %v405
        %v498 = vpop.f32.mrf.mxu0
        %v499 = vadd.f32 %v366, %v498
        %v500 = vpop.f32.mrf.mxu0
        %v501 = vadd.f32 %v366, %v500
        %502 = vmatmul.bf16.gmra.mxu0 %v406
        %v503 = vpop.f32.mrf.mxu0
        %v504 = vadd.f32 %v366, %v503
        %v505 = vpop.f32.mrf.mxu0
        %v506 = vadd.f32 %v366, %v505
        %507 = vmatmul.bf16.gmra.mxu0 %v407
        %v508 = vpop.f32.mrf.mxu0
        %v509 = vadd.f32 %v366, %v508
        %v510 = vpop.f32.mrf.mxu0
        %v511 = vadd.f32 %v366, %v510
        %512 = vdwg.mxu0
        %v513 = vlaneseq
        %v514 = vand.u32 %v513, 127
        %vm515 = vcmp.lt.s32.totalorder %v514, 8
        %v516 = vpack.c.bf16 %v476, %v474
        %v517 = vpack.c.bf16 %v481, %v479
        %v518 = vpack.c.bf16 %v486, %v484
        %v519 = vpack.c.bf16 %v491, %v489
        %v520 = vpack.c.bf16 %v496, %v494
        %v521 = vpack.c.bf16 %v501, %v499
        %v522 = vpack.c.bf16 %v506, %v504
        %v523 = vpack.c.bf16 %v511, %v509
        %532 = vrot.lane.b32.xlu0 %v516, 96
        %v533 = vpop.permute.xlu0 %532
        %534 = vrot.lane.b32.xlu0 %v517, 96
        %v535 = vpop.permute.xlu0 %534
        %536 = vrot.lane.b32.xlu0 %v518, 96
        %v537 = vpop.permute.xlu0 %536
        %538 = vrot.lane.b32.xlu0 %v519, 96
        %v539 = vpop.permute.xlu0 %538
        %540 = vrot.lane.b32.xlu0 %v520, 96
        %v541 = vpop.permute.xlu0 %540
        %542 = vrot.lane.b32.xlu0 %v521, 96
        %v543 = vpop.permute.xlu0 %542
        %544 = vrot.lane.b32.xlu0 %v522, 96
        %v545 = vpop.permute.xlu0 %544
        %546 = vrot.lane.b32.xlu0 %v523, 96
        %v547 = vpop.permute.xlu0 %546
        %vm548 = vcmask 64512
        %v550 = vsel %vm548, %v516, 0
        %v553 = vsel %vm548, %v517, 0
        %v556 = vsel %vm548, %v518, 0
        %v559 = vsel %vm548, %v519, 0
        %v562 = vsel %vm548, %v520, 0
        %v565 = vsel %vm548, %v521, 0
        %v568 = vsel %vm548, %v522, 0
        %v571 = vsel %vm548, %v523, 0
        %v574 = vsel %vm548, %v533, 0
        %v577 = vsel %vm548, %v535, 0
        %v580 = vsel %vm548, %v537, 0
        %v583 = vsel %vm548, %v539, 0
        %v586 = vsel %vm548, %v541, 0
        %v589 = vsel %vm548, %v543, 0
        %v592 = vsel %vm548, %v545, 0
        %v595 = vsel %vm548, %v547, 0
        %597 = vmatpush.bf16.xpose.msra.mxu0 %v595
        %598 = vmatpush.bf16.xpose.msra.mxu0 %v592
        %599 = vmatpush.bf16.xpose.msra.mxu0 %v589
        %600 = vmatpush.bf16.xpose.msra.mxu0 %v586
        %601 = vmatpush.bf16.xpose.msra.mxu0 %v583
        %602 = vmatpush.bf16.xpose.msra.mxu0 %v580
        %603 = vmatpush.bf16.xpose.msra.mxu0 %v577
        %604 = vmatpush.bf16.xpose.msra.mxu0 %v574
        %605 = vmatmul.bf16.gmra.mxu0 %v550
        %v606 = vpop.f32.mrf.mxu0
        %v607 = vadd.f32 0.0, %v606
        %v608 = vpop.f32.mrf.mxu0
        %v609 = vadd.f32 0.0, %v608
        %610 = vmatmul.bf16.gmra.mxu0 %v553
        %v611 = vpop.f32.mrf.mxu0
        %v612 = vadd.f32 0.0, %v611
        %v613 = vpop.f32.mrf.mxu0
        %v614 = vadd.f32 0.0, %v613
        %615 = vmatmul.bf16.gmra.mxu0 %v556
        %v616 = vpop.f32.mrf.mxu0
        %v617 = vadd.f32 0.0, %v616
        %v618 = vpop.f32.mrf.mxu0
        %v619 = vadd.f32 0.0, %v618
        %620 = vmatmul.bf16.gmra.mxu0 %v559
        %v621 = vpop.f32.mrf.mxu0
        %v622 = vadd.f32 0.0, %v621
        %v623 = vpop.f32.mrf.mxu0
        %v624 = vadd.f32 0.0, %v623
        %625 = vmatmul.bf16.gmra.mxu0 %v562
        %v626 = vpop.f32.mrf.mxu0
        %v627 = vadd.f32 0.0, %v626
        %v628 = vpop.f32.mrf.mxu0
        %v629 = vadd.f32 0.0, %v628
        %630 = vmatmul.bf16.gmra.mxu0 %v565
        %v631 = vpop.f32.mrf.mxu0
        %v632 = vadd.f32 0.0, %v631
        %v633 = vpop.f32.mrf.mxu0
        %v634 = vadd.f32 0.0, %v633
        %635 = vmatmul.bf16.gmra.mxu0 %v568
        %v636 = vpop.f32.mrf.mxu0
        %v637 = vadd.f32 0.0, %v636
        %v638 = vpop.f32.mrf.mxu0
        %v639 = vadd.f32 0.0, %v638
        %640 = vmatmul.bf16.gmra.mxu0 %v571
        %v641 = vpop.f32.mrf.mxu0
        %v642 = vadd.f32 0.0, %v641
        %v643 = vpop.f32.mrf.mxu0
        %v644 = vadd.f32 0.0, %v643
        %645 = vdwg.mxu0
        %v646 = vsel %vm515, %v607, -1e+30
        %v647 = vsel %vm515, %v609, -1e+30
        %v648 = vsel %vm515, %v612, -1e+30
        %v649 = vsel %vm515, %v614, -1e+30
        %v650 = vsel %vm515, %v617, -1e+30
        %v651 = vsel %vm515, %v619, -1e+30
        %v652 = vsel %vm515, %v622, -1e+30
        %v653 = vsel %vm515, %v624, -1e+30
        %v654 = vsel %vm515, %v627, -1e+30
        %v655 = vsel %vm515, %v629, -1e+30
        %v656 = vsel %vm515, %v632, -1e+30
        %v657 = vsel %vm515, %v634, -1e+30
        %v658 = vsel %vm515, %v637, -1e+30
        %v659 = vsel %vm515, %v639, -1e+30
        %v660 = vsel %vm515, %v642, -1e+30
        %v661 = vsel %vm515, %v644, -1e+30
        %662 = vmax.xlane.f32.xlu0 %v646
        %v663 = vpop.xlane.xlu0 %662
        %664 = vmax.xlane.f32.xlu0 %v647
        %v665 = vpop.xlane.xlu0 %664
        %666 = vmax.xlane.f32.xlu0 %v648
        %v667 = vpop.xlane.xlu0 %666
        %668 = vmax.xlane.f32.xlu0 %v649
        %v669 = vpop.xlane.xlu0 %668
        %670 = vmax.xlane.f32.xlu0 %v650
        %v671 = vpop.xlane.xlu0 %670
        %672 = vmax.xlane.f32.xlu0 %v651
        %v673 = vpop.xlane.xlu0 %672
        %674 = vmax.xlane.f32.xlu0 %v652
        %v675 = vpop.xlane.xlu0 %674
        %676 = vmax.xlane.f32.xlu0 %v653
        %v677 = vpop.xlane.xlu0 %676
        %678 = vmax.xlane.f32.xlu0 %v654
        %v679 = vpop.xlane.xlu0 %678
        %680 = vmax.xlane.f32.xlu0 %v655
        %v681 = vpop.xlane.xlu0 %680
        %682 = vmax.xlane.f32.xlu0 %v656
        %v683 = vpop.xlane.xlu0 %682
        %684 = vmax.xlane.f32.xlu0 %v657
        %v685 = vpop.xlane.xlu0 %684
        %686 = vmax.xlane.f32.xlu0 %v658
        %v687 = vpop.xlane.xlu0 %686
        %688 = vmax.xlane.f32.xlu0 %v659
        %v689 = vpop.xlane.xlu0 %688
        %690 = vmax.xlane.f32.xlu0 %v660
        %v691 = vpop.xlane.xlu0 %690
        %692 = vmax.xlane.f32.xlu0 %v661
        %v693 = vpop.xlane.xlu0 %692
        %v694 = vsub.f32 %v646, %v663
        %v695 = vsub.f32 %v647, %v665
        %v696 = vsub.f32 %v648, %v667
        %v697 = vsub.f32 %v649, %v669
        %v698 = vsub.f32 %v650, %v671
        %v699 = vsub.f32 %v651, %v673
        %v700 = vsub.f32 %v652, %v675
        %v701 = vsub.f32 %v653, %v677
        %v702 = vsub.f32 %v654, %v679
        %v703 = vsub.f32 %v655, %v681
        %v704 = vsub.f32 %v656, %v683
        %v705 = vsub.f32 %v657, %v685
        %v706 = vsub.f32 %v658, %v687
        %v707 = vsub.f32 %v659, %v689
        %v708 = vsub.f32 %v660, %v691
        %v709 = vsub.f32 %v661, %v693
        %v710 = vmul.f32 %v694, 1.442695
        %v711 = vpow.pop %v710
        %v712 = vmul.f32 %v695, 1.442695
        %v713 = vpow.pop %v712
        %v714 = vmul.f32 %v696, 1.442695
        %v715 = vpow.pop %v714
        %v716 = vmul.f32 %v697, 1.442695
        %v717 = vpow.pop %v716
        %v718 = vmul.f32 %v698, 1.442695
        %v719 = vpow.pop %v718
        %v720 = vmul.f32 %v699, 1.442695
        %v721 = vpow.pop %v720
        %v722 = vmul.f32 %v700, 1.442695
        %v723 = vpow.pop %v722
        %v724 = vmul.f32 %v701, 1.442695
        %v725 = vpow.pop %v724
        %v726 = vmul.f32 %v702, 1.442695
        %v727 = vpow.pop %v726
        %v728 = vmul.f32 %v703, 1.442695
        %v729 = vpow.pop %v728
        %v730 = vmul.f32 %v704, 1.442695
        %v731 = vpow.pop %v730
        %v732 = vmul.f32 %v705, 1.442695
        %v733 = vpow.pop %v732
        %v734 = vmul.f32 %v706, 1.442695
        %v735 = vpow.pop %v734
        %v736 = vmul.f32 %v707, 1.442695
        %v737 = vpow.pop %v736
        %v738 = vmul.f32 %v708, 1.442695
        %v739 = vpow.pop %v738
        %v740 = vmul.f32 %v709, 1.442695
        %v741 = vpow.pop %v740
        %v742 = vpack.c.bf16 %v713, %v711
        %v743 = vpack.c.bf16 %v717, %v715
        %v744 = vpack.c.bf16 %v721, %v719
        %v745 = vpack.c.bf16 %v725, %v723
        %v746 = vpack.c.bf16 %v729, %v727
        %v747 = vpack.c.bf16 %v733, %v731
        %v748 = vpack.c.bf16 %v737, %v735
        %v749 = vpack.c.bf16 %v741, %v739
        %v750 = vunpack.c.l.bf16 %v742
        %v751 = vunpack.c.h.bf16 %v742
        %v752 = vunpack.c.l.bf16 %v743
        %v753 = vunpack.c.h.bf16 %v743
        %v754 = vunpack.c.l.bf16 %v744
        %v755 = vunpack.c.h.bf16 %v744
        %v756 = vunpack.c.l.bf16 %v745
        %v757 = vunpack.c.h.bf16 %v745
        %v758 = vunpack.c.l.bf16 %v746
        %v759 = vunpack.c.h.bf16 %v746
        %v760 = vunpack.c.l.bf16 %v747
        %v761 = vunpack.c.h.bf16 %v747
        %v762 = vunpack.c.l.bf16 %v748
        %v763 = vunpack.c.h.bf16 %v748
        %v764 = vunpack.c.l.bf16 %v749
        %v765 = vunpack.c.h.bf16 %v749
        %766 = vadd.xlane.f32.xlu0 %v750
        %v767 = vpop.xlane.xlu0 %766
        %768 = vadd.xlane.f32.xlu0 %v751
        %v769 = vpop.xlane.xlu0 %768
        %770 = vadd.xlane.f32.xlu0 %v752
        %v771 = vpop.xlane.xlu0 %770
        %772 = vadd.xlane.f32.xlu0 %v753
        %v773 = vpop.xlane.xlu0 %772
        %774 = vadd.xlane.f32.xlu0 %v754
        %v775 = vpop.xlane.xlu0 %774
        %776 = vadd.xlane.f32.xlu0 %v755
        %v777 = vpop.xlane.xlu0 %776
        %778 = vadd.xlane.f32.xlu0 %v756
        %v779 = vpop.xlane.xlu0 %778
        %780 = vadd.xlane.f32.xlu0 %v757
        %v781 = vpop.xlane.xlu0 %780
        %782 = vadd.xlane.f32.xlu0 %v758
        %v783 = vpop.xlane.xlu0 %782
        %784 = vadd.xlane.f32.xlu0 %v759
        %v785 = vpop.xlane.xlu0 %784
        %786 = vadd.xlane.f32.xlu0 %v760
        %v787 = vpop.xlane.xlu0 %786
        %788 = vadd.xlane.f32.xlu0 %v761
        %v789 = vpop.xlane.xlu0 %788
        %790 = vadd.xlane.f32.xlu0 %v762
        %v791 = vpop.xlane.xlu0 %790
        %792 = vadd.xlane.f32.xlu0 %v763
        %v793 = vpop.xlane.xlu0 %792
        %794 = vadd.xlane.f32.xlu0 %v764
        %v795 = vpop.xlane.xlu0 %794
        %796 = vadd.xlane.f32.xlu0 %v765
        %v797 = vpop.xlane.xlu0 %796
        %798 = vrot.lane.b32.xlu0 %v516, 64
        %v799 = vpop.permute.xlu0 %798
        %800 = vrot.lane.b32.xlu0 %v517, 64
        %v801 = vpop.permute.xlu0 %800
        %802 = vrot.lane.b32.xlu0 %v518, 64
        %v803 = vpop.permute.xlu0 %802
        %804 = vrot.lane.b32.xlu0 %v519, 64
        %v805 = vpop.permute.xlu0 %804
        %806 = vrot.lane.b32.xlu0 %v520, 64
        %v807 = vpop.permute.xlu0 %806
        %808 = vrot.lane.b32.xlu0 %v521, 64
        %v809 = vpop.permute.xlu0 %808
        %810 = vrot.lane.b32.xlu0 %v522, 64
        %v811 = vpop.permute.xlu0 %810
        %812 = vrot.lane.b32.xlu0 %v523, 64
        %v813 = vpop.permute.xlu0 %812
        %822 = vmatpush.bf16.msra.mxu0 %v813
        %823 = vmatpush.bf16.msra.mxu0 %v811
        %824 = vmatpush.bf16.msra.mxu0 %v809
        %825 = vmatpush.bf16.msra.mxu0 %v807
        %826 = vmatpush.bf16.msra.mxu0 %v805
        %827 = vmatpush.bf16.msra.mxu0 %v803
        %828 = vmatpush.bf16.msra.mxu0 %v801
        %829 = vmatpush.bf16.msra.mxu0 %v799
        %830 = vmatmul.bf16.gmra.mxu0 %v742
        %v831 = vpop.f32.mrf.mxu0
        %v832 = vadd.f32 0.0, %v831
        %v833 = vpop.f32.mrf.mxu0
        %v834 = vadd.f32 0.0, %v833
        %835 = vmatmul.bf16.gmra.mxu0 %v743
        %v836 = vpop.f32.mrf.mxu0
        %v837 = vadd.f32 0.0, %v836
        %v838 = vpop.f32.mrf.mxu0
        %v839 = vadd.f32 0.0, %v838
        %840 = vmatmul.bf16.gmra.mxu0 %v744
        %v841 = vpop.f32.mrf.mxu0
        %v842 = vadd.f32 0.0, %v841
        %v843 = vpop.f32.mrf.mxu0
        %v844 = vadd.f32 0.0, %v843
        %845 = vmatmul.bf16.gmra.mxu0 %v745
        %v846 = vpop.f32.mrf.mxu0
        %v847 = vadd.f32 0.0, %v846
        %v848 = vpop.f32.mrf.mxu0
        %v849 = vadd.f32 0.0, %v848
        %850 = vmatmul.bf16.gmra.mxu0 %v746
        %v851 = vpop.f32.mrf.mxu0
        %v852 = vadd.f32 0.0, %v851
        %v853 = vpop.f32.mrf.mxu0
        %v854 = vadd.f32 0.0, %v853
        %855 = vmatmul.bf16.gmra.mxu0 %v747
        %v856 = vpop.f32.mrf.mxu0
        %v857 = vadd.f32 0.0, %v856
        %v858 = vpop.f32.mrf.mxu0
        %v859 = vadd.f32 0.0, %v858
        %860 = vmatmul.bf16.gmra.mxu0 %v748
        %v861 = vpop.f32.mrf.mxu0
        %v862 = vadd.f32 0.0, %v861
        %v863 = vpop.f32.mrf.mxu0
        %v864 = vadd.f32 0.0, %v863
        %865 = vmatmul.bf16.gmra.mxu0 %v749
        %v866 = vpop.f32.mrf.mxu0
        %v867 = vadd.f32 0.0, %v866
        %v868 = vpop.f32.mrf.mxu0
        %v869 = vadd.f32 0.0, %v868
        %870 = vdwg.mxu0
        %v871 = vrcp.pop %v767
        %v872 = vrcp.pop %v769
        %v873 = vrcp.pop %v771
        %v874 = vrcp.pop %v773
        %v875 = vrcp.pop %v775
        %v876 = vrcp.pop %v777
        %v877 = vrcp.pop %v779
        %v878 = vrcp.pop %v781
        %v879 = vrcp.pop %v783
        %v880 = vrcp.pop %v785
        %v881 = vrcp.pop %v787
        %v882 = vrcp.pop %v789
        %v883 = vrcp.pop %v791
        %v884 = vrcp.pop %v793
        %v885 = vrcp.pop %v795
        %v886 = vrcp.pop %v797
        %v887 = vmul.f32 %v832, %v871
        %v888 = vmul.f32 %v834, %v872
        %v889 = vmul.f32 %v837, %v873
        %v890 = vmul.f32 %v839, %v874
        %v891 = vmul.f32 %v842, %v875
        %v892 = vmul.f32 %v844, %v876
        %v893 = vmul.f32 %v847, %v877
        %v894 = vmul.f32 %v849, %v878
        %v895 = vmul.f32 %v852, %v879
        %v896 = vmul.f32 %v854, %v880
        %v897 = vmul.f32 %v857, %v881
        %v898 = vmul.f32 %v859, %v882
        %v899 = vmul.f32 %v862, %v883
        %v900 = vmul.f32 %v864, %v884
        %v901 = vmul.f32 %v867, %v885
        %v902 = vmul.f32 %v869, %v886
        %v903 = vpack.c.bf16 %v887, %v887
        %v904 = vpack.c.bf16 %v888, %v888
        %v905 = vpack.c.bf16 %v889, %v889
        %v906 = vpack.c.bf16 %v890, %v890
        %v907 = vpack.c.bf16 %v891, %v891
        %v908 = vpack.c.bf16 %v892, %v892
        %v909 = vpack.c.bf16 %v893, %v893
        %v910 = vpack.c.bf16 %v894, %v894
        %v911 = vpack.c.bf16 %v895, %v895
        %v912 = vpack.c.bf16 %v896, %v896
        %v913 = vpack.c.bf16 %v897, %v897
        %v914 = vpack.c.bf16 %v898, %v898
        %v915 = vpack.c.bf16 %v899, %v899
        %v916 = vpack.c.bf16 %v900, %v900
        %v917 = vpack.c.bf16 %v901, %v901
        %v918 = vpack.c.bf16 %v902, %v902
        %919 = vrot.lane.b32.xlu0 %v516, 120
        %v920 = vpop.permute.xlu0 %919
        %921 = vrot.lane.b32.xlu0 %v517, 120
        %v922 = vpop.permute.xlu0 %921
        %923 = vrot.lane.b32.xlu0 %v518, 120
        %v924 = vpop.permute.xlu0 %923
        %925 = vrot.lane.b32.xlu0 %v519, 120
        %v926 = vpop.permute.xlu0 %925
        %927 = vrot.lane.b32.xlu0 %v520, 120
        %v928 = vpop.permute.xlu0 %927
        %929 = vrot.lane.b32.xlu0 %v521, 120
        %v930 = vpop.permute.xlu0 %929
        %931 = vrot.lane.b32.xlu0 %v522, 120
        %v932 = vpop.permute.xlu0 %931
        %933 = vrot.lane.b32.xlu0 %v523, 120
        %v934 = vpop.permute.xlu0 %933
        %935 = vrot.lane.b32.xlu0 %v516, 88
        %v936 = vpop.permute.xlu0 %935
        %937 = vrot.lane.b32.xlu0 %v517, 88
        %v938 = vpop.permute.xlu0 %937
        %939 = vrot.lane.b32.xlu0 %v518, 88
        %v940 = vpop.permute.xlu0 %939
        %941 = vrot.lane.b32.xlu0 %v519, 88
        %v942 = vpop.permute.xlu0 %941
        %943 = vrot.lane.b32.xlu0 %v520, 88
        %v944 = vpop.permute.xlu0 %943
        %945 = vrot.lane.b32.xlu0 %v521, 88
        %v946 = vpop.permute.xlu0 %945
        %947 = vrot.lane.b32.xlu0 %v522, 88
        %v948 = vpop.permute.xlu0 %947
        %949 = vrot.lane.b32.xlu0 %v523, 88
        %v950 = vpop.permute.xlu0 %949
        %v952 = vsel %vm548, %v920, 0
        %v955 = vsel %vm548, %v922, 0
        %v958 = vsel %vm548, %v924, 0
        %v961 = vsel %vm548, %v926, 0
        %v964 = vsel %vm548, %v928, 0
        %v967 = vsel %vm548, %v930, 0
        %v970 = vsel %vm548, %v932, 0
        %v973 = vsel %vm548, %v934, 0
        %v976 = vsel %vm548, %v936, 0
        %v979 = vsel %vm548, %v938, 0
        %v982 = vsel %vm548, %v940, 0
        %v985 = vsel %vm548, %v942, 0
        %v988 = vsel %vm548, %v944, 0
        %v991 = vsel %vm548, %v946, 0
        %v994 = vsel %vm548, %v948, 0
        %v997 = vsel %vm548, %v950, 0
        %999 = vmatpush.bf16.xpose.msra.mxu0 %v997
        %1000 = vmatpush.bf16.xpose.msra.mxu0 %v994
        %1001 = vmatpush.bf16.xpose.msra.mxu0 %v991
        %1002 = vmatpush.bf16.xpose.msra.mxu0 %v988
        %1003 = vmatpush.bf16.xpose.msra.mxu0 %v985
        %1004 = vmatpush.bf16.xpose.msra.mxu0 %v982
        %1005 = vmatpush.bf16.xpose.msra.mxu0 %v979
        %1006 = vmatpush.bf16.xpose.msra.mxu0 %v976
        %1007 = vmatmul.bf16.gmra.mxu0 %v952
        %v1008 = vpop.f32.mrf.mxu0
        %v1009 = vadd.f32 0.0, %v1008
        %v1010 = vpop.f32.mrf.mxu0
        %v1011 = vadd.f32 0.0, %v1010
        %1012 = vmatmul.bf16.gmra.mxu0 %v955
        %v1013 = vpop.f32.mrf.mxu0
        %v1014 = vadd.f32 0.0, %v1013
        %v1015 = vpop.f32.mrf.mxu0
        %v1016 = vadd.f32 0.0, %v1015
        %1017 = vmatmul.bf16.gmra.mxu0 %v958
        %v1018 = vpop.f32.mrf.mxu0
        %v1019 = vadd.f32 0.0, %v1018
        %v1020 = vpop.f32.mrf.mxu0
        %v1021 = vadd.f32 0.0, %v1020
        %1022 = vmatmul.bf16.gmra.mxu0 %v961
        %v1023 = vpop.f32.mrf.mxu0
        %v1024 = vadd.f32 0.0, %v1023
        %v1025 = vpop.f32.mrf.mxu0
        %v1026 = vadd.f32 0.0, %v1025
        %1027 = vmatmul.bf16.gmra.mxu0 %v964
        %v1028 = vpop.f32.mrf.mxu0
        %v1029 = vadd.f32 0.0, %v1028
        %v1030 = vpop.f32.mrf.mxu0
        %v1031 = vadd.f32 0.0, %v1030
        %1032 = vmatmul.bf16.gmra.mxu0 %v967
        %v1033 = vpop.f32.mrf.mxu0
        %v1034 = vadd.f32 0.0, %v1033
        %v1035 = vpop.f32.mrf.mxu0
        %v1036 = vadd.f32 0.0, %v1035
        %1037 = vmatmul.bf16.gmra.mxu0 %v970
        %v1038 = vpop.f32.mrf.mxu0
        %v1039 = vadd.f32 0.0, %v1038
        %v1040 = vpop.f32.mrf.mxu0
        %v1041 = vadd.f32 0.0, %v1040
        %1042 = vmatmul.bf16.gmra.mxu0 %v973
        %v1043 = vpop.f32.mrf.mxu0
        %v1044 = vadd.f32 0.0, %v1043
        %v1045 = vpop.f32.mrf.mxu0
        %v1046 = vadd.f32 0.0, %v1045
        %1047 = vdwg.mxu0
        %v1048 = vsel %vm515, %v1009, -1e+30
        %v1049 = vsel %vm515, %v1011, -1e+30
        %v1050 = vsel %vm515, %v1014, -1e+30
        %v1051 = vsel %vm515, %v1016, -1e+30
        %v1052 = vsel %vm515, %v1019, -1e+30
        %v1053 = vsel %vm515, %v1021, -1e+30
        %v1054 = vsel %vm515, %v1024, -1e+30
        %v1055 = vsel %vm515, %v1026, -1e+30
        %v1056 = vsel %vm515, %v1029, -1e+30
        %v1057 = vsel %vm515, %v1031, -1e+30
        %v1058 = vsel %vm515, %v1034, -1e+30
        %v1059 = vsel %vm515, %v1036, -1e+30
        %v1060 = vsel %vm515, %v1039, -1e+30
        %v1061 = vsel %vm515, %v1041, -1e+30
        %v1062 = vsel %vm515, %v1044, -1e+30
        %v1063 = vsel %vm515, %v1046, -1e+30
        %1064 = vmax.xlane.f32.xlu0 %v1048
        %v1065 = vpop.xlane.xlu0 %1064
        %1066 = vmax.xlane.f32.xlu0 %v1049
        %v1067 = vpop.xlane.xlu0 %1066
        %1068 = vmax.xlane.f32.xlu0 %v1050
        %v1069 = vpop.xlane.xlu0 %1068
        %1070 = vmax.xlane.f32.xlu0 %v1051
        %v1071 = vpop.xlane.xlu0 %1070
        %1072 = vmax.xlane.f32.xlu0 %v1052
        %v1073 = vpop.xlane.xlu0 %1072
        %1074 = vmax.xlane.f32.xlu0 %v1053
        %v1075 = vpop.xlane.xlu0 %1074
        %1076 = vmax.xlane.f32.xlu0 %v1054
        %v1077 = vpop.xlane.xlu0 %1076
        %1078 = vmax.xlane.f32.xlu0 %v1055
        %v1079 = vpop.xlane.xlu0 %1078
        %1080 = vmax.xlane.f32.xlu0 %v1056
        %v1081 = vpop.xlane.xlu0 %1080
        %1082 = vmax.xlane.f32.xlu0 %v1057
        %v1083 = vpop.xlane.xlu0 %1082
        %1084 = vmax.xlane.f32.xlu0 %v1058
        %v1085 = vpop.xlane.xlu0 %1084
        %1086 = vmax.xlane.f32.xlu0 %v1059
        %v1087 = vpop.xlane.xlu0 %1086
        %1088 = vmax.xlane.f32.xlu0 %v1060
        %v1089 = vpop.xlane.xlu0 %1088
        %1090 = vmax.xlane.f32.xlu0 %v1061
        %v1091 = vpop.xlane.xlu0 %1090
        %1092 = vmax.xlane.f32.xlu0 %v1062
        %v1093 = vpop.xlane.xlu0 %1092
        %1094 = vmax.xlane.f32.xlu0 %v1063
        %v1095 = vpop.xlane.xlu0 %1094
        %v1096 = vsub.f32 %v1048, %v1065
        %v1097 = vsub.f32 %v1049, %v1067
        %v1098 = vsub.f32 %v1050, %v1069
        %v1099 = vsub.f32 %v1051, %v1071
        %v1100 = vsub.f32 %v1052, %v1073
        %v1101 = vsub.f32 %v1053, %v1075
        %v1102 = vsub.f32 %v1054, %v1077
        %v1103 = vsub.f32 %v1055, %v1079
        %v1104 = vsub.f32 %v1056, %v1081
        %v1105 = vsub.f32 %v1057, %v1083
        %v1106 = vsub.f32 %v1058, %v1085
        %v1107 = vsub.f32 %v1059, %v1087
        %v1108 = vsub.f32 %v1060, %v1089
        %v1109 = vsub.f32 %v1061, %v1091
        %v1110 = vsub.f32 %v1062, %v1093
        %v1111 = vsub.f32 %v1063, %v1095
        %v1112 = vmul.f32 %v1096, 1.442695
        %v1113 = vpow.pop %v1112
        %v1114 = vmul.f32 %v1097, 1.442695
        %v1115 = vpow.pop %v1114
        %v1116 = vmul.f32 %v1098, 1.442695
        %v1117 = vpow.pop %v1116
        %v1118 = vmul.f32 %v1099, 1.442695
        %v1119 = vpow.pop %v1118
        %v1120 = vmul.f32 %v1100, 1.442695
        %v1121 = vpow.pop %v1120
        %v1122 = vmul.f32 %v1101, 1.442695
        %v1123 = vpow.pop %v1122
        %v1124 = vmul.f32 %v1102, 1.442695
        %v1125 = vpow.pop %v1124
        %v1126 = vmul.f32 %v1103, 1.442695
        %v1127 = vpow.pop %v1126
        %v1128 = vmul.f32 %v1104, 1.442695
        %v1129 = vpow.pop %v1128
        %v1130 = vmul.f32 %v1105, 1.442695
        %v1131 = vpow.pop %v1130
        %v1132 = vmul.f32 %v1106, 1.442695
        %v1133 = vpow.pop %v1132
        %v1134 = vmul.f32 %v1107, 1.442695
        %v1135 = vpow.pop %v1134
        %v1136 = vmul.f32 %v1108, 1.442695
        %v1137 = vpow.pop %v1136
        %v1138 = vmul.f32 %v1109, 1.442695
        %v1139 = vpow.pop %v1138
        %v1140 = vmul.f32 %v1110, 1.442695
        %v1141 = vpow.pop %v1140
        %v1142 = vmul.f32 %v1111, 1.442695
        %v1143 = vpow.pop %v1142
        %v1144 = vpack.c.bf16 %v1115, %v1113
        %v1145 = vpack.c.bf16 %v1119, %v1117
        %v1146 = vpack.c.bf16 %v1123, %v1121
        %v1147 = vpack.c.bf16 %v1127, %v1125
        %v1148 = vpack.c.bf16 %v1131, %v1129
        %v1149 = vpack.c.bf16 %v1135, %v1133
        %v1150 = vpack.c.bf16 %v1139, %v1137
        %v1151 = vpack.c.bf16 %v1143, %v1141
        %v1152 = vunpack.c.l.bf16 %v1144
        %v1153 = vunpack.c.h.bf16 %v1144
        %v1154 = vunpack.c.l.bf16 %v1145
        %v1155 = vunpack.c.h.bf16 %v1145
        %v1156 = vunpack.c.l.bf16 %v1146
        %v1157 = vunpack.c.h.bf16 %v1146
        %v1158 = vunpack.c.l.bf16 %v1147
        %v1159 = vunpack.c.h.bf16 %v1147
        %v1160 = vunpack.c.l.bf16 %v1148
        %v1161 = vunpack.c.h.bf16 %v1148
        %v1162 = vunpack.c.l.bf16 %v1149
        %v1163 = vunpack.c.h.bf16 %v1149
        %v1164 = vunpack.c.l.bf16 %v1150
        %v1165 = vunpack.c.h.bf16 %v1150
        %v1166 = vunpack.c.l.bf16 %v1151
        %v1167 = vunpack.c.h.bf16 %v1151
        %1168 = vadd.xlane.f32.xlu0 %v1152
        %v1169 = vpop.xlane.xlu0 %1168
        %1170 = vadd.xlane.f32.xlu0 %v1153
        %v1171 = vpop.xlane.xlu0 %1170
        %1172 = vadd.xlane.f32.xlu0 %v1154
        %v1173 = vpop.xlane.xlu0 %1172
        %1174 = vadd.xlane.f32.xlu0 %v1155
        %v1175 = vpop.xlane.xlu0 %1174
        %1176 = vadd.xlane.f32.xlu0 %v1156
        %v1177 = vpop.xlane.xlu0 %1176
        %1178 = vadd.xlane.f32.xlu0 %v1157
        %v1179 = vpop.xlane.xlu0 %1178
        %1180 = vadd.xlane.f32.xlu0 %v1158
        %v1181 = vpop.xlane.xlu0 %1180
        %1182 = vadd.xlane.f32.xlu0 %v1159
        %v1183 = vpop.xlane.xlu0 %1182
        %1184 = vadd.xlane.f32.xlu0 %v1160
        %v1185 = vpop.xlane.xlu0 %1184
        %1186 = vadd.xlane.f32.xlu0 %v1161
        %v1187 = vpop.xlane.xlu0 %1186
        %1188 = vadd.xlane.f32.xlu0 %v1162
        %v1189 = vpop.xlane.xlu0 %1188
        %1190 = vadd.xlane.f32.xlu0 %v1163
        %v1191 = vpop.xlane.xlu0 %1190
        %1192 = vadd.xlane.f32.xlu0 %v1164
        %v1193 = vpop.xlane.xlu0 %1192
        %1194 = vadd.xlane.f32.xlu0 %v1165
        %v1195 = vpop.xlane.xlu0 %1194
        %1196 = vadd.xlane.f32.xlu0 %v1166
        %v1197 = vpop.xlane.xlu0 %1196
        %1198 = vadd.xlane.f32.xlu0 %v1167
        %v1199 = vpop.xlane.xlu0 %1198
        %1200 = vrot.lane.b32.xlu0 %v516, 56
        %v1201 = vpop.permute.xlu0 %1200
        %1202 = vrot.lane.b32.xlu0 %v517, 56
        %v1203 = vpop.permute.xlu0 %1202
        %1204 = vrot.lane.b32.xlu0 %v518, 56
        %v1205 = vpop.permute.xlu0 %1204
        %1206 = vrot.lane.b32.xlu0 %v519, 56
        %v1207 = vpop.permute.xlu0 %1206
        %1208 = vrot.lane.b32.xlu0 %v520, 56
        %v1209 = vpop.permute.xlu0 %1208
        %1210 = vrot.lane.b32.xlu0 %v521, 56
        %v1211 = vpop.permute.xlu0 %1210
        %1212 = vrot.lane.b32.xlu0 %v522, 56
        %v1213 = vpop.permute.xlu0 %1212
        %1214 = vrot.lane.b32.xlu0 %v523, 56
        %v1215 = vpop.permute.xlu0 %1214
        %1224 = vmatpush.bf16.msra.mxu0 %v1215
        %1225 = vmatpush.bf16.msra.mxu0 %v1213
        %1226 = vmatpush.bf16.msra.mxu0 %v1211
        %1227 = vmatpush.bf16.msra.mxu0 %v1209
        %1228 = vmatpush.bf16.msra.mxu0 %v1207
        %1229 = vmatpush.bf16.msra.mxu0 %v1205
        %1230 = vmatpush.bf16.msra.mxu0 %v1203
        %1231 = vmatpush.bf16.msra.mxu0 %v1201
        %1232 = vmatmul.bf16.gmra.mxu0 %v1144
        %v1233 = vpop.f32.mrf.mxu0
        %v1234 = vadd.f32 0.0, %v1233
        %v1235 = vpop.f32.mrf.mxu0
        %v1236 = vadd.f32 0.0, %v1235
        %1237 = vmatmul.bf16.gmra.mxu0 %v1145
        %v1238 = vpop.f32.mrf.mxu0
        %v1239 = vadd.f32 0.0, %v1238
        %v1240 = vpop.f32.mrf.mxu0
        %v1241 = vadd.f32 0.0, %v1240
        %1242 = vmatmul.bf16.gmra.mxu0 %v1146
        %v1243 = vpop.f32.mrf.mxu0
        %v1244 = vadd.f32 0.0, %v1243
        %v1245 = vpop.f32.mrf.mxu0
        %v1246 = vadd.f32 0.0, %v1245
        %1247 = vmatmul.bf16.gmra.mxu0 %v1147
        %v1248 = vpop.f32.mrf.mxu0
        %v1249 = vadd.f32 0.0, %v1248
        %v1250 = vpop.f32.mrf.mxu0
        %v1251 = vadd.f32 0.0, %v1250
        %1252 = vmatmul.bf16.gmra.mxu0 %v1148
        %v1253 = vpop.f32.mrf.mxu0
        %v1254 = vadd.f32 0.0, %v1253
        %v1255 = vpop.f32.mrf.mxu0
        %v1256 = vadd.f32 0.0, %v1255
        %1257 = vmatmul.bf16.gmra.mxu0 %v1149
        %v1258 = vpop.f32.mrf.mxu0
        %v1259 = vadd.f32 0.0, %v1258
        %v1260 = vpop.f32.mrf.mxu0
        %v1261 = vadd.f32 0.0, %v1260
        %1262 = vmatmul.bf16.gmra.mxu0 %v1150
        %v1263 = vpop.f32.mrf.mxu0
        %v1264 = vadd.f32 0.0, %v1263
        %v1265 = vpop.f32.mrf.mxu0
        %v1266 = vadd.f32 0.0, %v1265
        %1267 = vmatmul.bf16.gmra.mxu0 %v1151
        %v1268 = vpop.f32.mrf.mxu0
        %v1269 = vadd.f32 0.0, %v1268
        %v1270 = vpop.f32.mrf.mxu0
        %v1271 = vadd.f32 0.0, %v1270
        %1272 = vdwg.mxu0
        %v1273 = vrcp.pop %v1169
        %v1274 = vrcp.pop %v1171
        %v1275 = vrcp.pop %v1173
        %v1276 = vrcp.pop %v1175
        %v1277 = vrcp.pop %v1177
        %v1278 = vrcp.pop %v1179
        %v1279 = vrcp.pop %v1181
        %v1280 = vrcp.pop %v1183
        %v1281 = vrcp.pop %v1185
        %v1282 = vrcp.pop %v1187
        %v1283 = vrcp.pop %v1189
        %v1284 = vrcp.pop %v1191
        %v1285 = vrcp.pop %v1193
        %v1286 = vrcp.pop %v1195
        %v1287 = vrcp.pop %v1197
        %v1288 = vrcp.pop %v1199
        %v1289 = vmul.f32 %v1234, %v1273
        %v1290 = vmul.f32 %v1236, %v1274
        %v1291 = vmul.f32 %v1239, %v1275
        %v1292 = vmul.f32 %v1241, %v1276
        %v1293 = vmul.f32 %v1244, %v1277
        %v1294 = vmul.f32 %v1246, %v1278
        %v1295 = vmul.f32 %v1249, %v1279
        %v1296 = vmul.f32 %v1251, %v1280
        %v1297 = vmul.f32 %v1254, %v1281
        %v1298 = vmul.f32 %v1256, %v1282
        %v1299 = vmul.f32 %v1259, %v1283
        %v1300 = vmul.f32 %v1261, %v1284
        %v1301 = vmul.f32 %v1264, %v1285
        %v1302 = vmul.f32 %v1266, %v1286
        %v1303 = vmul.f32 %v1269, %v1287
        %v1304 = vmul.f32 %v1271, %v1288
        %v1305 = vpack.c.bf16 %v1289, %v1289
        %v1306 = vpack.c.bf16 %v1290, %v1290
        %v1307 = vpack.c.bf16 %v1291, %v1291
        %v1308 = vpack.c.bf16 %v1292, %v1292
        %v1309 = vpack.c.bf16 %v1293, %v1293
        %v1310 = vpack.c.bf16 %v1294, %v1294
        %v1311 = vpack.c.bf16 %v1295, %v1295
        %v1312 = vpack.c.bf16 %v1296, %v1296
        %v1313 = vpack.c.bf16 %v1297, %v1297
        %v1314 = vpack.c.bf16 %v1298, %v1298
        %v1315 = vpack.c.bf16 %v1299, %v1299
        %v1316 = vpack.c.bf16 %v1300, %v1300
        %v1317 = vpack.c.bf16 %v1301, %v1301
        %v1318 = vpack.c.bf16 %v1302, %v1302
        %v1319 = vpack.c.bf16 %v1303, %v1303
        %v1320 = vpack.c.bf16 %v1304, %v1304
        %1321 = vrot.lane.b32.xlu0 %v516, 112
        %v1322 = vpop.permute.xlu0 %1321
        %1323 = vrot.lane.b32.xlu0 %v517, 112
        %v1324 = vpop.permute.xlu0 %1323
        %1325 = vrot.lane.b32.xlu0 %v518, 112
        %v1326 = vpop.permute.xlu0 %1325
        %1327 = vrot.lane.b32.xlu0 %v519, 112
        %v1328 = vpop.permute.xlu0 %1327
        %1329 = vrot.lane.b32.xlu0 %v520, 112
        %v1330 = vpop.permute.xlu0 %1329
        %1331 = vrot.lane.b32.xlu0 %v521, 112
        %v1332 = vpop.permute.xlu0 %1331
        %1333 = vrot.lane.b32.xlu0 %v522, 112
        %v1334 = vpop.permute.xlu0 %1333
        %1335 = vrot.lane.b32.xlu0 %v523, 112
        %v1336 = vpop.permute.xlu0 %1335
        %1337 = vrot.lane.b32.xlu0 %v516, 80
        %v1338 = vpop.permute.xlu0 %1337
        %1339 = vrot.lane.b32.xlu0 %v517, 80
        %v1340 = vpop.permute.xlu0 %1339
        %1341 = vrot.lane.b32.xlu0 %v518, 80
        %v1342 = vpop.permute.xlu0 %1341
        %1343 = vrot.lane.b32.xlu0 %v519, 80
        %v1344 = vpop.permute.xlu0 %1343
        %1345 = vrot.lane.b32.xlu0 %v520, 80
        %v1346 = vpop.permute.xlu0 %1345
        %1347 = vrot.lane.b32.xlu0 %v521, 80
        %v1348 = vpop.permute.xlu0 %1347
        %1349 = vrot.lane.b32.xlu0 %v522, 80
        %v1350 = vpop.permute.xlu0 %1349
        %1351 = vrot.lane.b32.xlu0 %v523, 80
        %v1352 = vpop.permute.xlu0 %1351
        %v1354 = vsel %vm548, %v1322, 0
        %v1357 = vsel %vm548, %v1324, 0
        %v1360 = vsel %vm548, %v1326, 0
        %v1363 = vsel %vm548, %v1328, 0
        %v1366 = vsel %vm548, %v1330, 0
        %v1369 = vsel %vm548, %v1332, 0
        %v1372 = vsel %vm548, %v1334, 0
        %v1375 = vsel %vm548, %v1336, 0
        %v1378 = vsel %vm548, %v1338, 0
        %v1381 = vsel %vm548, %v1340, 0
        %v1384 = vsel %vm548, %v1342, 0
        %v1387 = vsel %vm548, %v1344, 0
        %v1390 = vsel %vm548, %v1346, 0
        %v1393 = vsel %vm548, %v1348, 0
        %v1396 = vsel %vm548, %v1350, 0
        %v1399 = vsel %vm548, %v1352, 0
        %1401 = vmatpush.bf16.xpose.msra.mxu0 %v1399
        %1402 = vmatpush.bf16.xpose.msra.mxu0 %v1396
        %1403 = vmatpush.bf16.xpose.msra.mxu0 %v1393
        %1404 = vmatpush.bf16.xpose.msra.mxu0 %v1390
        %1405 = vmatpush.bf16.xpose.msra.mxu0 %v1387
        %1406 = vmatpush.bf16.xpose.msra.mxu0 %v1384
        %1407 = vmatpush.bf16.xpose.msra.mxu0 %v1381
        %1408 = vmatpush.bf16.xpose.msra.mxu0 %v1378
        %1409 = vmatmul.bf16.gmra.mxu0 %v1354
        %v1410 = vpop.f32.mrf.mxu0
        %v1411 = vadd.f32 0.0, %v1410
        %v1412 = vpop.f32.mrf.mxu0
        %v1413 = vadd.f32 0.0, %v1412
        %1414 = vmatmul.bf16.gmra.mxu0 %v1357
        %v1415 = vpop.f32.mrf.mxu0
        %v1416 = vadd.f32 0.0, %v1415
        %v1417 = vpop.f32.mrf.mxu0
        %v1418 = vadd.f32 0.0, %v1417
        %1419 = vmatmul.bf16.gmra.mxu0 %v1360
        %v1420 = vpop.f32.mrf.mxu0
        %v1421 = vadd.f32 0.0, %v1420
        %v1422 = vpop.f32.mrf.mxu0
        %v1423 = vadd.f32 0.0, %v1422
        %1424 = vmatmul.bf16.gmra.mxu0 %v1363
        %v1425 = vpop.f32.mrf.mxu0
        %v1426 = vadd.f32 0.0, %v1425
        %v1427 = vpop.f32.mrf.mxu0
        %v1428 = vadd.f32 0.0, %v1427
        %1429 = vmatmul.bf16.gmra.mxu0 %v1366
        %v1430 = vpop.f32.mrf.mxu0
        %v1431 = vadd.f32 0.0, %v1430
        %v1432 = vpop.f32.mrf.mxu0
        %v1433 = vadd.f32 0.0, %v1432
        %1434 = vmatmul.bf16.gmra.mxu0 %v1369
        %v1435 = vpop.f32.mrf.mxu0
        %v1436 = vadd.f32 0.0, %v1435
        %v1437 = vpop.f32.mrf.mxu0
        %v1438 = vadd.f32 0.0, %v1437
        %1439 = vmatmul.bf16.gmra.mxu0 %v1372
        %v1440 = vpop.f32.mrf.mxu0
        %v1441 = vadd.f32 0.0, %v1440
        %v1442 = vpop.f32.mrf.mxu0
        %v1443 = vadd.f32 0.0, %v1442
        %1444 = vmatmul.bf16.gmra.mxu0 %v1375
        %v1445 = vpop.f32.mrf.mxu0
        %v1446 = vadd.f32 0.0, %v1445
        %v1447 = vpop.f32.mrf.mxu0
        %v1448 = vadd.f32 0.0, %v1447
        %1449 = vdwg.mxu0
        %v1450 = vsel %vm515, %v1411, -1e+30
        %v1451 = vsel %vm515, %v1413, -1e+30
        %v1452 = vsel %vm515, %v1416, -1e+30
        %v1453 = vsel %vm515, %v1418, -1e+30
        %v1454 = vsel %vm515, %v1421, -1e+30
        %v1455 = vsel %vm515, %v1423, -1e+30
        %v1456 = vsel %vm515, %v1426, -1e+30
        %v1457 = vsel %vm515, %v1428, -1e+30
        %v1458 = vsel %vm515, %v1431, -1e+30
        %v1459 = vsel %vm515, %v1433, -1e+30
        %v1460 = vsel %vm515, %v1436, -1e+30
        %v1461 = vsel %vm515, %v1438, -1e+30
        %v1462 = vsel %vm515, %v1441, -1e+30
        %v1463 = vsel %vm515, %v1443, -1e+30
        %v1464 = vsel %vm515, %v1446, -1e+30
        %v1465 = vsel %vm515, %v1448, -1e+30
        %1466 = vmax.xlane.f32.xlu0 %v1450
        %v1467 = vpop.xlane.xlu0 %1466
        %1468 = vmax.xlane.f32.xlu0 %v1451
        %v1469 = vpop.xlane.xlu0 %1468
        %1470 = vmax.xlane.f32.xlu0 %v1452
        %v1471 = vpop.xlane.xlu0 %1470
        %1472 = vmax.xlane.f32.xlu0 %v1453
        %v1473 = vpop.xlane.xlu0 %1472
        %1474 = vmax.xlane.f32.xlu0 %v1454
        %v1475 = vpop.xlane.xlu0 %1474
        %1476 = vmax.xlane.f32.xlu0 %v1455
        %v1477 = vpop.xlane.xlu0 %1476
        %1478 = vmax.xlane.f32.xlu0 %v1456
        %v1479 = vpop.xlane.xlu0 %1478
        %1480 = vmax.xlane.f32.xlu0 %v1457
        %v1481 = vpop.xlane.xlu0 %1480
        %1482 = vmax.xlane.f32.xlu0 %v1458
        %v1483 = vpop.xlane.xlu0 %1482
        %1484 = vmax.xlane.f32.xlu0 %v1459
        %v1485 = vpop.xlane.xlu0 %1484
        %1486 = vmax.xlane.f32.xlu0 %v1460
        %v1487 = vpop.xlane.xlu0 %1486
        %1488 = vmax.xlane.f32.xlu0 %v1461
        %v1489 = vpop.xlane.xlu0 %1488
        %1490 = vmax.xlane.f32.xlu0 %v1462
        %v1491 = vpop.xlane.xlu0 %1490
        %1492 = vmax.xlane.f32.xlu0 %v1463
        %v1493 = vpop.xlane.xlu0 %1492
        %1494 = vmax.xlane.f32.xlu0 %v1464
        %v1495 = vpop.xlane.xlu0 %1494
        %1496 = vmax.xlane.f32.xlu0 %v1465
        %v1497 = vpop.xlane.xlu0 %1496
        %v1498 = vsub.f32 %v1450, %v1467
        %v1499 = vsub.f32 %v1451, %v1469
        %v1500 = vsub.f32 %v1452, %v1471
        %v1501 = vsub.f32 %v1453, %v1473
        %v1502 = vsub.f32 %v1454, %v1475
        %v1503 = vsub.f32 %v1455, %v1477
        %v1504 = vsub.f32 %v1456, %v1479
        %v1505 = vsub.f32 %v1457, %v1481
        %v1506 = vsub.f32 %v1458, %v1483
        %v1507 = vsub.f32 %v1459, %v1485
        %v1508 = vsub.f32 %v1460, %v1487
        %v1509 = vsub.f32 %v1461, %v1489
        %v1510 = vsub.f32 %v1462, %v1491
        %v1511 = vsub.f32 %v1463, %v1493
        %v1512 = vsub.f32 %v1464, %v1495
        %v1513 = vsub.f32 %v1465, %v1497
        %v1514 = vmul.f32 %v1498, 1.442695
        %v1515 = vpow.pop %v1514
        %v1516 = vmul.f32 %v1499, 1.442695
        %v1517 = vpow.pop %v1516
        %v1518 = vmul.f32 %v1500, 1.442695
        %v1519 = vpow.pop %v1518
        %v1520 = vmul.f32 %v1501, 1.442695
        %v1521 = vpow.pop %v1520
        %v1522 = vmul.f32 %v1502, 1.442695
        %v1523 = vpow.pop %v1522
        %v1524 = vmul.f32 %v1503, 1.442695
        %v1525 = vpow.pop %v1524
        %v1526 = vmul.f32 %v1504, 1.442695
        %v1527 = vpow.pop %v1526
        %v1528 = vmul.f32 %v1505, 1.442695
        %v1529 = vpow.pop %v1528
        %v1530 = vmul.f32 %v1506, 1.442695
        %v1531 = vpow.pop %v1530
        %v1532 = vmul.f32 %v1507, 1.442695
        %v1533 = vpow.pop %v1532
        %v1534 = vmul.f32 %v1508, 1.442695
        %v1535 = vpow.pop %v1534
        %v1536 = vmul.f32 %v1509, 1.442695
        %v1537 = vpow.pop %v1536
        %v1538 = vmul.f32 %v1510, 1.442695
        %v1539 = vpow.pop %v1538
        %v1540 = vmul.f32 %v1511, 1.442695
        %v1541 = vpow.pop %v1540
        %v1542 = vmul.f32 %v1512, 1.442695
        %v1543 = vpow.pop %v1542
        %v1544 = vmul.f32 %v1513, 1.442695
        %v1545 = vpow.pop %v1544
        %v1546 = vpack.c.bf16 %v1517, %v1515
        %v1547 = vpack.c.bf16 %v1521, %v1519
        %v1548 = vpack.c.bf16 %v1525, %v1523
        %v1549 = vpack.c.bf16 %v1529, %v1527
        %v1550 = vpack.c.bf16 %v1533, %v1531
        %v1551 = vpack.c.bf16 %v1537, %v1535
        %v1552 = vpack.c.bf16 %v1541, %v1539
        %v1553 = vpack.c.bf16 %v1545, %v1543
        %v1554 = vunpack.c.l.bf16 %v1546
        %v1555 = vunpack.c.h.bf16 %v1546
        %v1556 = vunpack.c.l.bf16 %v1547
        %v1557 = vunpack.c.h.bf16 %v1547
        %v1558 = vunpack.c.l.bf16 %v1548
        %v1559 = vunpack.c.h.bf16 %v1548
        %v1560 = vunpack.c.l.bf16 %v1549
        %v1561 = vunpack.c.h.bf16 %v1549
        %v1562 = vunpack.c.l.bf16 %v1550
        %v1563 = vunpack.c.h.bf16 %v1550
        %v1564 = vunpack.c.l.bf16 %v1551
        %v1565 = vunpack.c.h.bf16 %v1551
        %v1566 = vunpack.c.l.bf16 %v1552
        %v1567 = vunpack.c.h.bf16 %v1552
        %v1568 = vunpack.c.l.bf16 %v1553
        %v1569 = vunpack.c.h.bf16 %v1553
        %1570 = vadd.xlane.f32.xlu0 %v1554
        %v1571 = vpop.xlane.xlu0 %1570
        %1572 = vadd.xlane.f32.xlu0 %v1555
        %v1573 = vpop.xlane.xlu0 %1572
        %1574 = vadd.xlane.f32.xlu0 %v1556
        %v1575 = vpop.xlane.xlu0 %1574
        %1576 = vadd.xlane.f32.xlu0 %v1557
        %v1577 = vpop.xlane.xlu0 %1576
        %1578 = vadd.xlane.f32.xlu0 %v1558
        %v1579 = vpop.xlane.xlu0 %1578
        %1580 = vadd.xlane.f32.xlu0 %v1559
        %v1581 = vpop.xlane.xlu0 %1580
        %1582 = vadd.xlane.f32.xlu0 %v1560
        %v1583 = vpop.xlane.xlu0 %1582
        %1584 = vadd.xlane.f32.xlu0 %v1561
        %v1585 = vpop.xlane.xlu0 %1584
        %1586 = vadd.xlane.f32.xlu0 %v1562
        %v1587 = vpop.xlane.xlu0 %1586
        %1588 = vadd.xlane.f32.xlu0 %v1563
        %v1589 = vpop.xlane.xlu0 %1588
        %1590 = vadd.xlane.f32.xlu0 %v1564
        %v1591 = vpop.xlane.xlu0 %1590
        %1592 = vadd.xlane.f32.xlu0 %v1565
        %v1593 = vpop.xlane.xlu0 %1592
        %1594 = vadd.xlane.f32.xlu0 %v1566
        %v1595 = vpop.xlane.xlu0 %1594
        %1596 = vadd.xlane.f32.xlu0 %v1567
        %v1597 = vpop.xlane.xlu0 %1596
        %1598 = vadd.xlane.f32.xlu0 %v1568
        %v1599 = vpop.xlane.xlu0 %1598
        %1600 = vadd.xlane.f32.xlu0 %v1569
        %v1601 = vpop.xlane.xlu0 %1600
        %1602 = vrot.lane.b32.xlu0 %v516, 48
        %v1603 = vpop.permute.xlu0 %1602
        %1604 = vrot.lane.b32.xlu0 %v517, 48
        %v1605 = vpop.permute.xlu0 %1604
        %1606 = vrot.lane.b32.xlu0 %v518, 48
        %v1607 = vpop.permute.xlu0 %1606
        %1608 = vrot.lane.b32.xlu0 %v519, 48
        %v1609 = vpop.permute.xlu0 %1608
        %1610 = vrot.lane.b32.xlu0 %v520, 48
        %v1611 = vpop.permute.xlu0 %1610
        %1612 = vrot.lane.b32.xlu0 %v521, 48
        %v1613 = vpop.permute.xlu0 %1612
        %1614 = vrot.lane.b32.xlu0 %v522, 48
        %v1615 = vpop.permute.xlu0 %1614
        %1616 = vrot.lane.b32.xlu0 %v523, 48
        %v1617 = vpop.permute.xlu0 %1616
        %1626 = vmatpush.bf16.msra.mxu0 %v1617
        %1627 = vmatpush.bf16.msra.mxu0 %v1615
        %1628 = vmatpush.bf16.msra.mxu0 %v1613
        %1629 = vmatpush.bf16.msra.mxu0 %v1611
        %1630 = vmatpush.bf16.msra.mxu0 %v1609
        %1631 = vmatpush.bf16.msra.mxu0 %v1607
        %1632 = vmatpush.bf16.msra.mxu0 %v1605
        %1633 = vmatpush.bf16.msra.mxu0 %v1603
        %1634 = vmatmul.bf16.gmra.mxu0 %v1546
        %v1635 = vpop.f32.mrf.mxu0
        %v1636 = vadd.f32 0.0, %v1635
        %v1637 = vpop.f32.mrf.mxu0
        %v1638 = vadd.f32 0.0, %v1637
        %1639 = vmatmul.bf16.gmra.mxu0 %v1547
        %v1640 = vpop.f32.mrf.mxu0
        %v1641 = vadd.f32 0.0, %v1640
        %v1642 = vpop.f32.mrf.mxu0
        %v1643 = vadd.f32 0.0, %v1642
        %1644 = vmatmul.bf16.gmra.mxu0 %v1548
        %v1645 = vpop.f32.mrf.mxu0
        %v1646 = vadd.f32 0.0, %v1645
        %v1647 = vpop.f32.mrf.mxu0
        %v1648 = vadd.f32 0.0, %v1647
        %1649 = vmatmul.bf16.gmra.mxu0 %v1549
        %v1650 = vpop.f32.mrf.mxu0
        %v1651 = vadd.f32 0.0, %v1650
        %v1652 = vpop.f32.mrf.mxu0
        %v1653 = vadd.f32 0.0, %v1652
        %1654 = vmatmul.bf16.gmra.mxu0 %v1550
        %v1655 = vpop.f32.mrf.mxu0
        %v1656 = vadd.f32 0.0, %v1655
        %v1657 = vpop.f32.mrf.mxu0
        %v1658 = vadd.f32 0.0, %v1657
        %1659 = vmatmul.bf16.gmra.mxu0 %v1551
        %v1660 = vpop.f32.mrf.mxu0
        %v1661 = vadd.f32 0.0, %v1660
        %v1662 = vpop.f32.mrf.mxu0
        %v1663 = vadd.f32 0.0, %v1662
        %1664 = vmatmul.bf16.gmra.mxu0 %v1552
        %v1665 = vpop.f32.mrf.mxu0
        %v1666 = vadd.f32 0.0, %v1665
        %v1667 = vpop.f32.mrf.mxu0
        %v1668 = vadd.f32 0.0, %v1667
        %1669 = vmatmul.bf16.gmra.mxu0 %v1553
        %v1670 = vpop.f32.mrf.mxu0
        %v1671 = vadd.f32 0.0, %v1670
        %v1672 = vpop.f32.mrf.mxu0
        %v1673 = vadd.f32 0.0, %v1672
        %1674 = vdwg.mxu0
        %v1675 = vrcp.pop %v1571
        %v1676 = vrcp.pop %v1573
        %v1677 = vrcp.pop %v1575
        %v1678 = vrcp.pop %v1577
        %v1679 = vrcp.pop %v1579
        %v1680 = vrcp.pop %v1581
        %v1681 = vrcp.pop %v1583
        %v1682 = vrcp.pop %v1585
        %v1683 = vrcp.pop %v1587
        %v1684 = vrcp.pop %v1589
        %v1685 = vrcp.pop %v1591
        %v1686 = vrcp.pop %v1593
        %v1687 = vrcp.pop %v1595
        %v1688 = vrcp.pop %v1597
        %v1689 = vrcp.pop %v1599
        %v1690 = vrcp.pop %v1601
        %v1691 = vmul.f32 %v1636, %v1675
        %v1692 = vmul.f32 %v1638, %v1676
        %v1693 = vmul.f32 %v1641, %v1677
        %v1694 = vmul.f32 %v1643, %v1678
        %v1695 = vmul.f32 %v1646, %v1679
        %v1696 = vmul.f32 %v1648, %v1680
        %v1697 = vmul.f32 %v1651, %v1681
        %v1698 = vmul.f32 %v1653, %v1682
        %v1699 = vmul.f32 %v1656, %v1683
        %v1700 = vmul.f32 %v1658, %v1684
        %v1701 = vmul.f32 %v1661, %v1685
        %v1702 = vmul.f32 %v1663, %v1686
        %v1703 = vmul.f32 %v1666, %v1687
        %v1704 = vmul.f32 %v1668, %v1688
        %v1705 = vmul.f32 %v1671, %v1689
        %v1706 = vmul.f32 %v1673, %v1690
        %v1707 = vpack.c.bf16 %v1691, %v1691
        %v1708 = vpack.c.bf16 %v1692, %v1692
        %v1709 = vpack.c.bf16 %v1693, %v1693
        %v1710 = vpack.c.bf16 %v1694, %v1694
        %v1711 = vpack.c.bf16 %v1695, %v1695
        %v1712 = vpack.c.bf16 %v1696, %v1696
        %v1713 = vpack.c.bf16 %v1697, %v1697
        %v1714 = vpack.c.bf16 %v1698, %v1698
        %v1715 = vpack.c.bf16 %v1699, %v1699
        %v1716 = vpack.c.bf16 %v1700, %v1700
        %v1717 = vpack.c.bf16 %v1701, %v1701
        %v1718 = vpack.c.bf16 %v1702, %v1702
        %v1719 = vpack.c.bf16 %v1703, %v1703
        %v1720 = vpack.c.bf16 %v1704, %v1704
        %v1721 = vpack.c.bf16 %v1705, %v1705
        %v1722 = vpack.c.bf16 %v1706, %v1706
        %1723 = vrot.lane.b32.xlu0 %v516, 104
        %v1724 = vpop.permute.xlu0 %1723
        %1725 = vrot.lane.b32.xlu0 %v517, 104
        %v1726 = vpop.permute.xlu0 %1725
        %1727 = vrot.lane.b32.xlu0 %v518, 104
        %v1728 = vpop.permute.xlu0 %1727
        %1729 = vrot.lane.b32.xlu0 %v519, 104
        %v1730 = vpop.permute.xlu0 %1729
        %1731 = vrot.lane.b32.xlu0 %v520, 104
        %v1732 = vpop.permute.xlu0 %1731
        %1733 = vrot.lane.b32.xlu0 %v521, 104
        %v1734 = vpop.permute.xlu0 %1733
        %1735 = vrot.lane.b32.xlu0 %v522, 104
        %v1736 = vpop.permute.xlu0 %1735
        %1737 = vrot.lane.b32.xlu0 %v523, 104
        %v1738 = vpop.permute.xlu0 %1737
        %1739 = vrot.lane.b32.xlu0 %v516, 72
        %v1740 = vpop.permute.xlu0 %1739
        %1741 = vrot.lane.b32.xlu0 %v517, 72
        %v1742 = vpop.permute.xlu0 %1741
        %1743 = vrot.lane.b32.xlu0 %v518, 72
        %v1744 = vpop.permute.xlu0 %1743
        %1745 = vrot.lane.b32.xlu0 %v519, 72
        %v1746 = vpop.permute.xlu0 %1745
        %1747 = vrot.lane.b32.xlu0 %v520, 72
        %v1748 = vpop.permute.xlu0 %1747
        %1749 = vrot.lane.b32.xlu0 %v521, 72
        %v1750 = vpop.permute.xlu0 %1749
        %1751 = vrot.lane.b32.xlu0 %v522, 72
        %v1752 = vpop.permute.xlu0 %1751
        %1753 = vrot.lane.b32.xlu0 %v523, 72
        %v1754 = vpop.permute.xlu0 %1753
        %v1756 = vsel %vm548, %v1724, 0
        %v1759 = vsel %vm548, %v1726, 0
        %v1762 = vsel %vm548, %v1728, 0
        %v1765 = vsel %vm548, %v1730, 0
        %v1768 = vsel %vm548, %v1732, 0
        %v1771 = vsel %vm548, %v1734, 0
        %v1774 = vsel %vm548, %v1736, 0
        %v1777 = vsel %vm548, %v1738, 0
        %v1780 = vsel %vm548, %v1740, 0
        %v1783 = vsel %vm548, %v1742, 0
        %v1786 = vsel %vm548, %v1744, 0
        %v1789 = vsel %vm548, %v1746, 0
        %v1792 = vsel %vm548, %v1748, 0
        %v1795 = vsel %vm548, %v1750, 0
        %v1798 = vsel %vm548, %v1752, 0
        %v1801 = vsel %vm548, %v1754, 0
        %1803 = vmatpush.bf16.xpose.msra.mxu0 %v1801
        %1804 = vmatpush.bf16.xpose.msra.mxu0 %v1798
        %1805 = vmatpush.bf16.xpose.msra.mxu0 %v1795
        %1806 = vmatpush.bf16.xpose.msra.mxu0 %v1792
        %1807 = vmatpush.bf16.xpose.msra.mxu0 %v1789
        %1808 = vmatpush.bf16.xpose.msra.mxu0 %v1786
        %1809 = vmatpush.bf16.xpose.msra.mxu0 %v1783
        %1810 = vmatpush.bf16.xpose.msra.mxu0 %v1780
        %1811 = vmatmul.bf16.gmra.mxu0 %v1756
        %v1812 = vpop.f32.mrf.mxu0
        %v1813 = vadd.f32 0.0, %v1812
        %v1814 = vpop.f32.mrf.mxu0
        %v1815 = vadd.f32 0.0, %v1814
        %1816 = vmatmul.bf16.gmra.mxu0 %v1759
        %v1817 = vpop.f32.mrf.mxu0
        %v1818 = vadd.f32 0.0, %v1817
        %v1819 = vpop.f32.mrf.mxu0
        %v1820 = vadd.f32 0.0, %v1819
        %1821 = vmatmul.bf16.gmra.mxu0 %v1762
        %v1822 = vpop.f32.mrf.mxu0
        %v1823 = vadd.f32 0.0, %v1822
        %v1824 = vpop.f32.mrf.mxu0
        %v1825 = vadd.f32 0.0, %v1824
        %1826 = vmatmul.bf16.gmra.mxu0 %v1765
        %v1827 = vpop.f32.mrf.mxu0
        %v1828 = vadd.f32 0.0, %v1827
        %v1829 = vpop.f32.mrf.mxu0
        %v1830 = vadd.f32 0.0, %v1829
        %1831 = vmatmul.bf16.gmra.mxu0 %v1768
        %v1832 = vpop.f32.mrf.mxu0
        %v1833 = vadd.f32 0.0, %v1832
        %v1834 = vpop.f32.mrf.mxu0
        %v1835 = vadd.f32 0.0, %v1834
        %1836 = vmatmul.bf16.gmra.mxu0 %v1771
        %v1837 = vpop.f32.mrf.mxu0
        %v1838 = vadd.f32 0.0, %v1837
        %v1839 = vpop.f32.mrf.mxu0
        %v1840 = vadd.f32 0.0, %v1839
        %1841 = vmatmul.bf16.gmra.mxu0 %v1774
        %v1842 = vpop.f32.mrf.mxu0
        %v1843 = vadd.f32 0.0, %v1842
        %v1844 = vpop.f32.mrf.mxu0
        %v1845 = vadd.f32 0.0, %v1844
        %1846 = vmatmul.bf16.gmra.mxu0 %v1777
        %v1847 = vpop.f32.mrf.mxu0
        %v1848 = vadd.f32 0.0, %v1847
        %v1849 = vpop.f32.mrf.mxu0
        %v1850 = vadd.f32 0.0, %v1849
        %1851 = vdwg.mxu0
        %v1852 = vsel %vm515, %v1813, -1e+30
        %v1853 = vsel %vm515, %v1815, -1e+30
        %v1854 = vsel %vm515, %v1818, -1e+30
        %v1855 = vsel %vm515, %v1820, -1e+30
        %v1856 = vsel %vm515, %v1823, -1e+30
        %v1857 = vsel %vm515, %v1825, -1e+30
        %v1858 = vsel %vm515, %v1828, -1e+30
        %v1859 = vsel %vm515, %v1830, -1e+30
        %v1860 = vsel %vm515, %v1833, -1e+30
        %v1861 = vsel %vm515, %v1835, -1e+30
        %v1862 = vsel %vm515, %v1838, -1e+30
        %v1863 = vsel %vm515, %v1840, -1e+30
        %v1864 = vsel %vm515, %v1843, -1e+30
        %v1865 = vsel %vm515, %v1845, -1e+30
        %v1866 = vsel %vm515, %v1848, -1e+30
        %v1867 = vsel %vm515, %v1850, -1e+30
        %1868 = vmax.xlane.f32.xlu0 %v1852
        %v1869 = vpop.xlane.xlu0 %1868
        %1870 = vmax.xlane.f32.xlu0 %v1853
        %v1871 = vpop.xlane.xlu0 %1870
        %1872 = vmax.xlane.f32.xlu0 %v1854
        %v1873 = vpop.xlane.xlu0 %1872
        %1874 = vmax.xlane.f32.xlu0 %v1855
        %v1875 = vpop.xlane.xlu0 %1874
        %1876 = vmax.xlane.f32.xlu0 %v1856
        %v1877 = vpop.xlane.xlu0 %1876
        %1878 = vmax.xlane.f32.xlu0 %v1857
        %v1879 = vpop.xlane.xlu0 %1878
        %1880 = vmax.xlane.f32.xlu0 %v1858
        %v1881 = vpop.xlane.xlu0 %1880
        %1882 = vmax.xlane.f32.xlu0 %v1859
        %v1883 = vpop.xlane.xlu0 %1882
        %1884 = vmax.xlane.f32.xlu0 %v1860
        %v1885 = vpop.xlane.xlu0 %1884
        %1886 = vmax.xlane.f32.xlu0 %v1861
        %v1887 = vpop.xlane.xlu0 %1886
        %1888 = vmax.xlane.f32.xlu0 %v1862
        %v1889 = vpop.xlane.xlu0 %1888
        %1890 = vmax.xlane.f32.xlu0 %v1863
        %v1891 = vpop.xlane.xlu0 %1890
        %1892 = vmax.xlane.f32.xlu0 %v1864
        %v1893 = vpop.xlane.xlu0 %1892
        %1894 = vmax.xlane.f32.xlu0 %v1865
        %v1895 = vpop.xlane.xlu0 %1894
        %1896 = vmax.xlane.f32.xlu0 %v1866
        %v1897 = vpop.xlane.xlu0 %1896
        %1898 = vmax.xlane.f32.xlu0 %v1867
        %v1899 = vpop.xlane.xlu0 %1898
        %v1900 = vsub.f32 %v1852, %v1869
        %v1901 = vsub.f32 %v1853, %v1871
        %v1902 = vsub.f32 %v1854, %v1873
        %v1903 = vsub.f32 %v1855, %v1875
        %v1904 = vsub.f32 %v1856, %v1877
        %v1905 = vsub.f32 %v1857, %v1879
        %v1906 = vsub.f32 %v1858, %v1881
        %v1907 = vsub.f32 %v1859, %v1883
        %v1908 = vsub.f32 %v1860, %v1885
        %v1909 = vsub.f32 %v1861, %v1887
        %v1910 = vsub.f32 %v1862, %v1889
        %v1911 = vsub.f32 %v1863, %v1891
        %v1912 = vsub.f32 %v1864, %v1893
        %v1913 = vsub.f32 %v1865, %v1895
        %v1914 = vsub.f32 %v1866, %v1897
        %v1915 = vsub.f32 %v1867, %v1899
        %v1916 = vmul.f32 %v1900, 1.442695
        %v1917 = vpow.pop %v1916
        %v1918 = vmul.f32 %v1901, 1.442695
        %v1919 = vpow.pop %v1918
        %v1920 = vmul.f32 %v1902, 1.442695
        %v1921 = vpow.pop %v1920
        %v1922 = vmul.f32 %v1903, 1.442695
        %v1923 = vpow.pop %v1922
        %v1924 = vmul.f32 %v1904, 1.442695
        %v1925 = vpow.pop %v1924
        %v1926 = vmul.f32 %v1905, 1.442695
        %v1927 = vpow.pop %v1926
        %v1928 = vmul.f32 %v1906, 1.442695
        %v1929 = vpow.pop %v1928
        %v1930 = vmul.f32 %v1907, 1.442695
        %v1931 = vpow.pop %v1930
        %v1932 = vmul.f32 %v1908, 1.442695
        %v1933 = vpow.pop %v1932
        %v1934 = vmul.f32 %v1909, 1.442695
        %v1935 = vpow.pop %v1934
        %v1936 = vmul.f32 %v1910, 1.442695
        %v1937 = vpow.pop %v1936
        %v1938 = vmul.f32 %v1911, 1.442695
        %v1939 = vpow.pop %v1938
        %v1940 = vmul.f32 %v1912, 1.442695
        %v1941 = vpow.pop %v1940
        %v1942 = vmul.f32 %v1913, 1.442695
        %v1943 = vpow.pop %v1942
        %v1944 = vmul.f32 %v1914, 1.442695
        %v1945 = vpow.pop %v1944
        %v1946 = vmul.f32 %v1915, 1.442695
        %v1947 = vpow.pop %v1946
        %v1948 = vpack.c.bf16 %v1919, %v1917
        %v1949 = vpack.c.bf16 %v1923, %v1921
        %v1950 = vpack.c.bf16 %v1927, %v1925
        %v1951 = vpack.c.bf16 %v1931, %v1929
        %v1952 = vpack.c.bf16 %v1935, %v1933
        %v1953 = vpack.c.bf16 %v1939, %v1937
        %v1954 = vpack.c.bf16 %v1943, %v1941
        %v1955 = vpack.c.bf16 %v1947, %v1945
        %v1956 = vunpack.c.l.bf16 %v1948
        %v1957 = vunpack.c.h.bf16 %v1948
        %v1958 = vunpack.c.l.bf16 %v1949
        %v1959 = vunpack.c.h.bf16 %v1949
        %v1960 = vunpack.c.l.bf16 %v1950
        %v1961 = vunpack.c.h.bf16 %v1950
        %v1962 = vunpack.c.l.bf16 %v1951
        %v1963 = vunpack.c.h.bf16 %v1951
        %v1964 = vunpack.c.l.bf16 %v1952
        %v1965 = vunpack.c.h.bf16 %v1952
        %v1966 = vunpack.c.l.bf16 %v1953
        %v1967 = vunpack.c.h.bf16 %v1953
        %v1968 = vunpack.c.l.bf16 %v1954
        %v1969 = vunpack.c.h.bf16 %v1954
        %v1970 = vunpack.c.l.bf16 %v1955
        %v1971 = vunpack.c.h.bf16 %v1955
        %1972 = vadd.xlane.f32.xlu0 %v1956
        %v1973 = vpop.xlane.xlu0 %1972
        %1974 = vadd.xlane.f32.xlu0 %v1957
        %v1975 = vpop.xlane.xlu0 %1974
        %1976 = vadd.xlane.f32.xlu0 %v1958
        %v1977 = vpop.xlane.xlu0 %1976
        %1978 = vadd.xlane.f32.xlu0 %v1959
        %v1979 = vpop.xlane.xlu0 %1978
        %1980 = vadd.xlane.f32.xlu0 %v1960
        %v1981 = vpop.xlane.xlu0 %1980
        %1982 = vadd.xlane.f32.xlu0 %v1961
        %v1983 = vpop.xlane.xlu0 %1982
        %1984 = vadd.xlane.f32.xlu0 %v1962
        %v1985 = vpop.xlane.xlu0 %1984
        %1986 = vadd.xlane.f32.xlu0 %v1963
        %v1987 = vpop.xlane.xlu0 %1986
        %1988 = vadd.xlane.f32.xlu0 %v1964
        %v1989 = vpop.xlane.xlu0 %1988
        %1990 = vadd.xlane.f32.xlu0 %v1965
        %v1991 = vpop.xlane.xlu0 %1990
        %1992 = vadd.xlane.f32.xlu0 %v1966
        %v1993 = vpop.xlane.xlu0 %1992
        %1994 = vadd.xlane.f32.xlu0 %v1967
        %v1995 = vpop.xlane.xlu0 %1994
        %1996 = vadd.xlane.f32.xlu0 %v1968
        %v1997 = vpop.xlane.xlu0 %1996
        %1998 = vadd.xlane.f32.xlu0 %v1969
        %v1999 = vpop.xlane.xlu0 %1998
        %2000 = vadd.xlane.f32.xlu0 %v1970
        %v2001 = vpop.xlane.xlu0 %2000
        %2002 = vadd.xlane.f32.xlu0 %v1971
        %v2003 = vpop.xlane.xlu0 %2002
        %2004 = vrot.lane.b32.xlu0 %v516, 40
        %v2005 = vpop.permute.xlu0 %2004
        %2006 = vrot.lane.b32.xlu0 %v517, 40
        %v2007 = vpop.permute.xlu0 %2006
        %2008 = vrot.lane.b32.xlu0 %v518, 40
        %v2009 = vpop.permute.xlu0 %2008
        %2010 = vrot.lane.b32.xlu0 %v519, 40
        %v2011 = vpop.permute.xlu0 %2010
        %2012 = vrot.lane.b32.xlu0 %v520, 40
        %v2013 = vpop.permute.xlu0 %2012
        %2014 = vrot.lane.b32.xlu0 %v521, 40
        %v2015 = vpop.permute.xlu0 %2014
        %2016 = vrot.lane.b32.xlu0 %v522, 40
        %v2017 = vpop.permute.xlu0 %2016
        %2018 = vrot.lane.b32.xlu0 %v523, 40
        %v2019 = vpop.permute.xlu0 %2018
        %2028 = vmatpush.bf16.msra.mxu0 %v2019
        %2029 = vmatpush.bf16.msra.mxu0 %v2017
        %2030 = vmatpush.bf16.msra.mxu0 %v2015
        %2031 = vmatpush.bf16.msra.mxu0 %v2013
        %2032 = vmatpush.bf16.msra.mxu0 %v2011
        %2033 = vmatpush.bf16.msra.mxu0 %v2009
        %2034 = vmatpush.bf16.msra.mxu0 %v2007
        %2035 = vmatpush.bf16.msra.mxu0 %v2005
        %2036 = vmatmul.bf16.gmra.mxu0 %v1948
        %v2037 = vpop.f32.mrf.mxu0
        %v2038 = vadd.f32 0.0, %v2037
        %v2039 = vpop.f32.mrf.mxu0
        %v2040 = vadd.f32 0.0, %v2039
        %2041 = vmatmul.bf16.gmra.mxu0 %v1949
        %v2042 = vpop.f32.mrf.mxu0
        %v2043 = vadd.f32 0.0, %v2042
        %v2044 = vpop.f32.mrf.mxu0
        %v2045 = vadd.f32 0.0, %v2044
        %2046 = vmatmul.bf16.gmra.mxu0 %v1950
        %v2047 = vpop.f32.mrf.mxu0
        %v2048 = vadd.f32 0.0, %v2047
        %v2049 = vpop.f32.mrf.mxu0
        %v2050 = vadd.f32 0.0, %v2049
        %2051 = vmatmul.bf16.gmra.mxu0 %v1951
        %v2052 = vpop.f32.mrf.mxu0
        %v2053 = vadd.f32 0.0, %v2052
        %v2054 = vpop.f32.mrf.mxu0
        %v2055 = vadd.f32 0.0, %v2054
        %2056 = vmatmul.bf16.gmra.mxu0 %v1952
        %v2057 = vpop.f32.mrf.mxu0
        %v2058 = vadd.f32 0.0, %v2057
        %v2059 = vpop.f32.mrf.mxu0
        %v2060 = vadd.f32 0.0, %v2059
        %2061 = vmatmul.bf16.gmra.mxu0 %v1953
        %v2062 = vpop.f32.mrf.mxu0
        %v2063 = vadd.f32 0.0, %v2062
        %v2064 = vpop.f32.mrf.mxu0
        %v2065 = vadd.f32 0.0, %v2064
        %2066 = vmatmul.bf16.gmra.mxu0 %v1954
        %v2067 = vpop.f32.mrf.mxu0
        %v2068 = vadd.f32 0.0, %v2067
        %v2069 = vpop.f32.mrf.mxu0
        %v2070 = vadd.f32 0.0, %v2069
        %2071 = vmatmul.bf16.gmra.mxu0 %v1955
        %v2072 = vpop.f32.mrf.mxu0
        %v2073 = vadd.f32 0.0, %v2072
        %v2074 = vpop.f32.mrf.mxu0
        %v2075 = vadd.f32 0.0, %v2074
        %2076 = vdwg.mxu0
        %v2077 = vrcp.pop %v1973
        %v2078 = vrcp.pop %v1975
        %v2079 = vrcp.pop %v1977
        %v2080 = vrcp.pop %v1979
        %v2081 = vrcp.pop %v1981
        %v2082 = vrcp.pop %v1983
        %v2083 = vrcp.pop %v1985
        %v2084 = vrcp.pop %v1987
        %v2085 = vrcp.pop %v1989
        %v2086 = vrcp.pop %v1991
        %v2087 = vrcp.pop %v1993
        %v2088 = vrcp.pop %v1995
        %v2089 = vrcp.pop %v1997
        %v2090 = vrcp.pop %v1999
        %v2091 = vrcp.pop %v2001
        %v2092 = vrcp.pop %v2003
        %v2093 = vmul.f32 %v2038, %v2077
        %v2094 = vmul.f32 %v2040, %v2078
        %v2095 = vmul.f32 %v2043, %v2079
        %v2096 = vmul.f32 %v2045, %v2080
        %v2097 = vmul.f32 %v2048, %v2081
        %v2098 = vmul.f32 %v2050, %v2082
        %v2099 = vmul.f32 %v2053, %v2083
        %v2100 = vmul.f32 %v2055, %v2084
        %v2101 = vmul.f32 %v2058, %v2085
        %v2102 = vmul.f32 %v2060, %v2086
        %v2103 = vmul.f32 %v2063, %v2087
        %v2104 = vmul.f32 %v2065, %v2088
        %v2105 = vmul.f32 %v2068, %v2089
        %v2106 = vmul.f32 %v2070, %v2090
        %v2107 = vmul.f32 %v2073, %v2091
        %v2108 = vmul.f32 %v2075, %v2092
        %v2109 = vpack.c.bf16 %v2093, %v2093
        %v2110 = vpack.c.bf16 %v2094, %v2094
        %v2111 = vpack.c.bf16 %v2095, %v2095
        %v2112 = vpack.c.bf16 %v2096, %v2096
        %v2113 = vpack.c.bf16 %v2097, %v2097
        %v2114 = vpack.c.bf16 %v2098, %v2098
        %v2115 = vpack.c.bf16 %v2099, %v2099
        %v2116 = vpack.c.bf16 %v2100, %v2100
        %v2117 = vpack.c.bf16 %v2101, %v2101
        %v2118 = vpack.c.bf16 %v2102, %v2102
        %v2119 = vpack.c.bf16 %v2103, %v2103
        %v2120 = vpack.c.bf16 %v2104, %v2104
        %v2121 = vpack.c.bf16 %v2105, %v2105
        %v2122 = vpack.c.bf16 %v2106, %v2106
        %v2123 = vpack.c.bf16 %v2107, %v2107
        %v2124 = vpack.c.bf16 %v2108, %v2108
        %v2141 = vunpack.c.l.b16 %v903
        %v2142 = vunpack.c.l.b16 %v904
        %v2143 = vunpack.c.l.b16 %v905
        %v2144 = vunpack.c.l.b16 %v906
        %v2145 = vunpack.c.l.b16 %v907
        %v2146 = vunpack.c.l.b16 %v908
        %v2147 = vunpack.c.l.b16 %v909
        %v2148 = vunpack.c.l.b16 %v910
        %v2149 = vunpack.c.l.b16 %v911
        %v2150 = vunpack.c.l.b16 %v912
        %v2151 = vunpack.c.l.b16 %v913
        %v2152 = vunpack.c.l.b16 %v914
        %v2153 = vunpack.c.l.b16 %v915
        %v2154 = vunpack.c.l.b16 %v916
        %v2155 = vunpack.c.l.b16 %v917
        %v2156 = vunpack.c.l.b16 %v918
        %v2157 = vpack.c.b16 %v2142, %v2141
        %v2158 = vpack.c.b16 %v2144, %v2143
        %v2159 = vpack.c.b16 %v2146, %v2145
        %v2160 = vpack.c.b16 %v2148, %v2147
        %v2161 = vpack.c.b16 %v2150, %v2149
        %v2162 = vpack.c.b16 %v2152, %v2151
        %v2163 = vpack.c.b16 %v2154, %v2153
        %v2164 = vpack.c.b16 %v2156, %v2155
        %v2181 = vunpack.c.l.b16 %v1305
        %v2182 = vunpack.c.l.b16 %v1306
        %v2183 = vunpack.c.l.b16 %v1307
        %v2184 = vunpack.c.l.b16 %v1308
        %v2185 = vunpack.c.l.b16 %v1309
        %v2186 = vunpack.c.l.b16 %v1310
        %v2187 = vunpack.c.l.b16 %v1311
        %v2188 = vunpack.c.l.b16 %v1312
        %v2189 = vunpack.c.l.b16 %v1313
        %v2190 = vunpack.c.l.b16 %v1314
        %v2191 = vunpack.c.l.b16 %v1315
        %v2192 = vunpack.c.l.b16 %v1316
        %v2193 = vunpack.c.l.b16 %v1317
        %v2194 = vunpack.c.l.b16 %v1318
        %v2195 = vunpack.c.l.b16 %v1319
        %v2196 = vunpack.c.l.b16 %v1320
        %v2197 = vpack.c.b16 %v2182, %v2181
        %v2198 = vpack.c.b16 %v2184, %v2183
        %v2199 = vpack.c.b16 %v2186, %v2185
        %v2200 = vpack.c.b16 %v2188, %v2187
        %v2201 = vpack.c.b16 %v2190, %v2189
        %v2202 = vpack.c.b16 %v2192, %v2191
        %v2203 = vpack.c.b16 %v2194, %v2193
        %v2204 = vpack.c.b16 %v2196, %v2195
        %2205 = vrot.lane.b32.xlu0 %v2197, 8
        %v2206 = vpop.permute.xlu0 %2205
        %2207 = vrot.lane.b32.xlu0 %v2198, 8
        %v2208 = vpop.permute.xlu0 %2207
        %2209 = vrot.lane.b32.xlu0 %v2199, 8
        %v2210 = vpop.permute.xlu0 %2209
        %2211 = vrot.lane.b32.xlu0 %v2200, 8
        %v2212 = vpop.permute.xlu0 %2211
        %2213 = vrot.lane.b32.xlu0 %v2201, 8
        %v2214 = vpop.permute.xlu0 %2213
        %2215 = vrot.lane.b32.xlu0 %v2202, 8
        %v2216 = vpop.permute.xlu0 %2215
        %2217 = vrot.lane.b32.xlu0 %v2203, 8
        %v2218 = vpop.permute.xlu0 %2217
        %2219 = vrot.lane.b32.xlu0 %v2204, 8
        %v2220 = vpop.permute.xlu0 %2219
        %v2237 = vunpack.c.l.b16 %v1707
        %v2238 = vunpack.c.l.b16 %v1708
        %v2239 = vunpack.c.l.b16 %v1709
        %v2240 = vunpack.c.l.b16 %v1710
        %v2241 = vunpack.c.l.b16 %v1711
        %v2242 = vunpack.c.l.b16 %v1712
        %v2243 = vunpack.c.l.b16 %v1713
        %v2244 = vunpack.c.l.b16 %v1714
        %v2245 = vunpack.c.l.b16 %v1715
        %v2246 = vunpack.c.l.b16 %v1716
        %v2247 = vunpack.c.l.b16 %v1717
        %v2248 = vunpack.c.l.b16 %v1718
        %v2249 = vunpack.c.l.b16 %v1719
        %v2250 = vunpack.c.l.b16 %v1720
        %v2251 = vunpack.c.l.b16 %v1721
        %v2252 = vunpack.c.l.b16 %v1722
        %v2253 = vpack.c.b16 %v2238, %v2237
        %v2254 = vpack.c.b16 %v2240, %v2239
        %v2255 = vpack.c.b16 %v2242, %v2241
        %v2256 = vpack.c.b16 %v2244, %v2243
        %v2257 = vpack.c.b16 %v2246, %v2245
        %v2258 = vpack.c.b16 %v2248, %v2247
        %v2259 = vpack.c.b16 %v2250, %v2249
        %v2260 = vpack.c.b16 %v2252, %v2251
        %2261 = vrot.lane.b32.xlu0 %v2253, 16
        %v2262 = vpop.permute.xlu0 %2261
        %2263 = vrot.lane.b32.xlu0 %v2254, 16
        %v2264 = vpop.permute.xlu0 %2263
        %2265 = vrot.lane.b32.xlu0 %v2255, 16
        %v2266 = vpop.permute.xlu0 %2265
        %2267 = vrot.lane.b32.xlu0 %v2256, 16
        %v2268 = vpop.permute.xlu0 %2267
        %2269 = vrot.lane.b32.xlu0 %v2257, 16
        %v2270 = vpop.permute.xlu0 %2269
        %2271 = vrot.lane.b32.xlu0 %v2258, 16
        %v2272 = vpop.permute.xlu0 %2271
        %2273 = vrot.lane.b32.xlu0 %v2259, 16
        %v2274 = vpop.permute.xlu0 %2273
        %2275 = vrot.lane.b32.xlu0 %v2260, 16
        %v2276 = vpop.permute.xlu0 %2275
        %v2293 = vunpack.c.l.b16 %v2109
        %v2294 = vunpack.c.l.b16 %v2110
        %v2295 = vunpack.c.l.b16 %v2111
        %v2296 = vunpack.c.l.b16 %v2112
        %v2297 = vunpack.c.l.b16 %v2113
        %v2298 = vunpack.c.l.b16 %v2114
        %v2299 = vunpack.c.l.b16 %v2115
        %v2300 = vunpack.c.l.b16 %v2116
        %v2301 = vunpack.c.l.b16 %v2117
        %v2302 = vunpack.c.l.b16 %v2118
        %v2303 = vunpack.c.l.b16 %v2119
        %v2304 = vunpack.c.l.b16 %v2120
        %v2305 = vunpack.c.l.b16 %v2121
        %v2306 = vunpack.c.l.b16 %v2122
        %v2307 = vunpack.c.l.b16 %v2123
        %v2308 = vunpack.c.l.b16 %v2124
        %v2309 = vpack.c.b16 %v2294, %v2293
        %v2310 = vpack.c.b16 %v2296, %v2295
        %v2311 = vpack.c.b16 %v2298, %v2297
        %v2312 = vpack.c.b16 %v2300, %v2299
        %v2313 = vpack.c.b16 %v2302, %v2301
        %v2314 = vpack.c.b16 %v2304, %v2303
        %v2315 = vpack.c.b16 %v2306, %v2305
        %v2316 = vpack.c.b16 %v2308, %v2307
        %2317 = vrot.lane.b32.xlu0 %v2309, 24
        %v2318 = vpop.permute.xlu0 %2317
        %2319 = vrot.lane.b32.xlu0 %v2310, 24
        %v2320 = vpop.permute.xlu0 %2319
        %2321 = vrot.lane.b32.xlu0 %v2311, 24
        %v2322 = vpop.permute.xlu0 %2321
        %2323 = vrot.lane.b32.xlu0 %v2312, 24
        %v2324 = vpop.permute.xlu0 %2323
        %2325 = vrot.lane.b32.xlu0 %v2313, 24
        %v2326 = vpop.permute.xlu0 %2325
        %2327 = vrot.lane.b32.xlu0 %v2314, 24
        %v2328 = vpop.permute.xlu0 %2327
        %2329 = vrot.lane.b32.xlu0 %v2315, 24
        %v2330 = vpop.permute.xlu0 %2329
        %2331 = vrot.lane.b32.xlu0 %v2316, 24
        %v2332 = vpop.permute.xlu0 %2331
        %v2335 = vsel %vm548, %v2157, %v2206
        %v2338 = vsel %vm548, %v2158, %v2208
        %v2341 = vsel %vm548, %v2159, %v2210
        %v2344 = vsel %vm548, %v2160, %v2212
        %v2347 = vsel %vm548, %v2161, %v2214
        %v2350 = vsel %vm548, %v2162, %v2216
        %v2353 = vsel %vm548, %v2163, %v2218
        %v2356 = vsel %vm548, %v2164, %v2220
        %vm2357 = vcmask 130048
        %v2359 = vsel %vm2357, %v2335, %v2262
        %v2361 = vsel %vm2357, %v2338, %v2264
        %v2363 = vsel %vm2357, %v2341, %v2266
        %v2365 = vsel %vm2357, %v2344, %v2268
        %v2367 = vsel %vm2357, %v2347, %v2270
        %v2369 = vsel %vm2357, %v2350, %v2272
        %v2371 = vsel %vm2357, %v2353, %v2274
        %v2373 = vsel %vm2357, %v2356, %v2276
        %vm2374 = vcmask 195584
        %v2376 = vsel %vm2374, %v2359, %v2318
        %v2378 = vsel %vm2374, %v2361, %v2320
        %v2380 = vsel %vm2374, %v2363, %v2322
        %v2382 = vsel %vm2374, %v2365, %v2324
        %v2384 = vsel %vm2374, %v2367, %v2326
        %v2386 = vsel %vm2374, %v2369, %v2328
        %v2388 = vsel %vm2374, %v2371, %v2330
        %v2390 = vsel %vm2374, %v2373, %v2332
        %v2391 = vld [vmem:[#allocation2] sm:$0xff]
        %v2392 = vld [vmem:[#allocation2 + $0x8] sm:$0xff]
        %v2393 = vld [vmem:[#allocation2 + $0x10] sm:$0xff]
        %v2394 = vld [vmem:[#allocation2 + $0x18] sm:$0xff]
        %v2395 = vld [vmem:[#allocation2 + $0x20] sm:$0xff]
        %v2396 = vld [vmem:[#allocation2 + $0x28] sm:$0xff]
        %v2397 = vld [vmem:[#allocation2 + $0x30] sm:$0xff]
        %v2398 = vld [vmem:[#allocation2 + $0x38] sm:$0xff]
        %v2399 = vld [vmem:[#allocation2 + $0x40] sm:$0xff]
        %v2400 = vld [vmem:[#allocation2 + $0x48] sm:$0xff]
        %v2401 = vld [vmem:[#allocation2 + $0x50] sm:$0xff]
        %v2402 = vld [vmem:[#allocation2 + $0x58] sm:$0xff]
        %v2403 = vld [vmem:[#allocation2 + $0x60] sm:$0xff]
        %v2404 = vld [vmem:[#allocation2 + $0x68] sm:$0xff]
        %v2405 = vld [vmem:[#allocation2 + $0x70] sm:$0xff]
        %v2406 = vld [vmem:[#allocation2 + $0x78] sm:$0xff]
        %v2407 = vld [vmem:[%s310] sm:$0xf]
        %v2408 = vld [vmem:[%s310 + $0x4] sm:$0xf]
        %v2409 = vld [vmem:[%s310 + $0x8] sm:$0xf]
        %v2410 = vld [vmem:[%s310 + $0xc] sm:$0xf]
        %v2415 = vunpack.c.l.b16 %v2407
        %v2416 = vunpack.c.l.b16 %v2408
        %v2417 = vunpack.c.l.b16 %v2409
        %v2418 = vunpack.c.l.b16 %v2410
        %v2419 = vpack.c.b16 %v2416, %v2415
        %v2420 = vpack.c.b16 %v2418, %v2417
        %vm2423 = vcmask 261120
        %v2424 = vsel %vm2423, %v2376, 0
        %v2426 = vsel %vm2423, %v2378, 0
        %v2428 = vsel %vm2423, %v2380, 0
        %v2430 = vsel %vm2423, %v2382, 0
        %v2432 = vsel %vm2423, %v2384, 0
        %v2434 = vsel %vm2423, %v2386, 0
        %v2436 = vsel %vm2423, %v2388, 0
        %v2438 = vsel %vm2423, %v2390, 0
        %2440 = vmatpush.bf16.msra.mxu0 0
        %2441 = vmatpush.bf16.msra.mxu0 0
        %2442 = vmatpush.bf16.msra.mxu0 0
        %2443 = vmatpush.bf16.msra.mxu0 0
        %2444 = vmatpush.bf16.msra.mxu0 0
        %2445 = vmatpush.bf16.msra.mxu0 0
        %2446 = vmatpush.bf16.msra.mxu0 %v2420
        %2447 = vmatpush.bf16.msra.mxu0 %v2419
        %2448 = vmatmul.bf16.gmra.mxu0 %v2424
        %v2449 = vpop.f32.mrf.mxu0
        %v2450 = vadd.f32 0.0, %v2449
        %v2451 = vpop.f32.mrf.mxu0
        %v2452 = vadd.f32 0.0, %v2451
        %2453 = vmatmul.bf16.gmra.mxu0 %v2426
        %v2454 = vpop.f32.mrf.mxu0
        %v2455 = vadd.f32 0.0, %v2454
        %v2456 = vpop.f32.mrf.mxu0
        %v2457 = vadd.f32 0.0, %v2456
        %2458 = vmatmul.bf16.gmra.mxu0 %v2428
        %v2459 = vpop.f32.mrf.mxu0
        %v2460 = vadd.f32 0.0, %v2459
        %v2461 = vpop.f32.mrf.mxu0
        %v2462 = vadd.f32 0.0, %v2461
        %2463 = vmatmul.bf16.gmra.mxu0 %v2430
        %v2464 = vpop.f32.mrf.mxu0
        %v2465 = vadd.f32 0.0, %v2464
        %v2466 = vpop.f32.mrf.mxu0
        %v2467 = vadd.f32 0.0, %v2466
        %2468 = vmatmul.bf16.gmra.mxu0 %v2432
        %v2469 = vpop.f32.mrf.mxu0
        %v2470 = vadd.f32 0.0, %v2469
        %v2471 = vpop.f32.mrf.mxu0
        %v2472 = vadd.f32 0.0, %v2471
        %2473 = vmatmul.bf16.gmra.mxu0 %v2434
        %v2474 = vpop.f32.mrf.mxu0
        %v2475 = vadd.f32 0.0, %v2474
        %v2476 = vpop.f32.mrf.mxu0
        %v2477 = vadd.f32 0.0, %v2476
        %2478 = vmatmul.bf16.gmra.mxu0 %v2436
        %v2479 = vpop.f32.mrf.mxu0
        %v2480 = vadd.f32 0.0, %v2479
        %v2481 = vpop.f32.mrf.mxu0
        %v2482 = vadd.f32 0.0, %v2481
        %2483 = vmatmul.bf16.gmra.mxu0 %v2438
        %v2484 = vpop.f32.mrf.mxu0
        %v2485 = vadd.f32 0.0, %v2484
        %v2486 = vpop.f32.mrf.mxu0
        %v2487 = vadd.f32 0.0, %v2486
        %2488 = vdwg.mxu0
        %v2489 = vadd.f32 %v2391, %v2450
        %v2490 = vadd.f32 %v2392, %v2452
        %v2491 = vadd.f32 %v2393, %v2455
        %v2492 = vadd.f32 %v2394, %v2457
        %v2493 = vadd.f32 %v2395, %v2460
        %v2494 = vadd.f32 %v2396, %v2462
        %v2495 = vadd.f32 %v2397, %v2465
        %v2496 = vadd.f32 %v2398, %v2467
        %v2497 = vadd.f32 %v2399, %v2470
        %v2498 = vadd.f32 %v2400, %v2472
        %v2499 = vadd.f32 %v2401, %v2475
        %v2500 = vadd.f32 %v2402, %v2477
        %v2501 = vadd.f32 %v2403, %v2480
        %v2502 = vadd.f32 %v2404, %v2482
        %v2503 = vadd.f32 %v2405, %v2485
        %v2504 = vadd.f32 %v2406, %v2487
        %2505 = vst [vmem:[#allocation2] sm:$0xff] %v2489
        %2506 = vst [vmem:[#allocation2 + $0x8] sm:$0xff] %v2490
        %2507 = vst [vmem:[#allocation2 + $0x10] sm:$0xff] %v2491
        %2508 = vst [vmem:[#allocation2 + $0x18] sm:$0xff] %v2492
        %2509 = vst [vmem:[#allocation2 + $0x20] sm:$0xff] %v2493
        %2510 = vst [vmem:[#allocation2 + $0x28] sm:$0xff] %v2494
        %2511 = vst [vmem:[#allocation2 + $0x30] sm:$0xff] %v2495
        %2512 = vst [vmem:[#allocation2 + $0x38] sm:$0xff] %v2496
        %2513 = vst [vmem:[#allocation2 + $0x40] sm:$0xff] %v2497
        %2514 = vst [vmem:[#allocation2 + $0x48] sm:$0xff] %v2498
        %2515 = vst [vmem:[#allocation2 + $0x50] sm:$0xff] %v2499
        %2516 = vst [vmem:[#allocation2 + $0x58] sm:$0xff] %v2500
        %2517 = vst [vmem:[#allocation2 + $0x60] sm:$0xff] %v2501
        %2518 = vst [vmem:[#allocation2 + $0x68] sm:$0xff] %v2502
        %2519 = vst [vmem:[#allocation2 + $0x70] sm:$0xff] %v2503
        %2520 = vst [vmem:[#allocation2 + $0x78] sm:$0xff] %v2504
        // Predicated region
        $region49: #{tpu_custom_call.1} parent=39 // pred_check
          %p2521 = pneg %p312
        $region50: #{tpu_custom_call.1} parent=39 // pred_check_branch
          %2523 = sbr.rel (%p2521) target = $region52
        $region51: #{tpu_custom_call.1} parent=39 // pred_region
          %v2524 = vld [vmem:[#allocation2] sm:$0xff]
          %v2525 = vld [vmem:[#allocation2 + $0x8] sm:$0xff]
          %v2526 = vld [vmem:[#allocation2 + $0x10] sm:$0xff]
          %v2527 = vld [vmem:[#allocation2 + $0x18] sm:$0xff]
          %v2528 = vld [vmem:[#allocation2 + $0x20] sm:$0xff]
          %v2529 = vld [vmem:[#allocation2 + $0x28] sm:$0xff]
          %v2530 = vld [vmem:[#allocation2 + $0x30] sm:$0xff]
          %v2531 = vld [vmem:[#allocation2 + $0x38] sm:$0xff]
          %v2532 = vld [vmem:[#allocation2 + $0x40] sm:$0xff]
          %v2533 = vld [vmem:[#allocation2 + $0x48] sm:$0xff]
          %v2534 = vld [vmem:[#allocation2 + $0x50] sm:$0xff]
          %v2535 = vld [vmem:[#allocation2 + $0x58] sm:$0xff]
          %v2536 = vld [vmem:[#allocation2 + $0x60] sm:$0xff]
          %v2537 = vld [vmem:[#allocation2 + $0x68] sm:$0xff]
          %v2538 = vld [vmem:[#allocation2 + $0x70] sm:$0xff]
          %v2539 = vld [vmem:[#allocation2 + $0x78] sm:$0xff]
          %v2540 = vld [vmem:[%s4] sm:$0x1]
          %v2542 = vperm.slane %v2540, 0
          %v2544 = vadd.f32 %v2524, %v2542
          %v2545 = vadd.f32 %v2525, %v2542
          %v2546 = vadd.f32 %v2526, %v2542
          %v2547 = vadd.f32 %v2527, %v2542
          %v2548 = vadd.f32 %v2528, %v2542
          %v2549 = vadd.f32 %v2529, %v2542
          %v2550 = vadd.f32 %v2530, %v2542
          %v2551 = vadd.f32 %v2531, %v2542
          %v2552 = vadd.f32 %v2532, %v2542
          %v2553 = vadd.f32 %v2533, %v2542
          %v2554 = vadd.f32 %v2534, %v2542
          %v2555 = vadd.f32 %v2535, %v2542
          %v2556 = vadd.f32 %v2536, %v2542
          %v2557 = vadd.f32 %v2537, %v2542
          %v2558 = vadd.f32 %v2538, %v2542
          %v2559 = vadd.f32 %v2539, %v2542
          %2560 = vst [vmem:[%s297] sm:$0xff] %v2544
          %2561 = vst [vmem:[%s297 + $0x8] sm:$0xff] %v2545
          %2562 = vst [vmem:[%s297 + $0x10] sm:$0xff] %v2546
          %2563 = vst [vmem:[%s297 + $0x18] sm:$0xff] %v2547
          %2564 = vst [vmem:[%s297 + $0x20] sm:$0xff] %v2548
          %2565 = vst [vmem:[%s297 + $0x28] sm:$0xff] %v2549
          %2566 = vst [vmem:[%s297 + $0x30] sm:$0xff] %v2550
          %2567 = vst [vmem:[%s297 + $0x38] sm:$0xff] %v2551
          %2568 = vst [vmem:[%s297 + $0x40] sm:$0xff] %v2552
          %2569 = vst [vmem:[%s297 + $0x48] sm:$0xff] %v2553
          %2570 = vst [vmem:[%s297 + $0x50] sm:$0xff] %v2554
          %2571 = vst [vmem:[%s297 + $0x58] sm:$0xff] %v2555
          %2572 = vst [vmem:[%s297 + $0x60] sm:$0xff] %v2556
          %2573 = vst [vmem:[%s297 + $0x68] sm:$0xff] %v2557
          %2574 = vst [vmem:[%s297 + $0x70] sm:$0xff] %v2558
          %2575 = vst [vmem:[%s297 + $0x78] sm:$0xff] %v2559
        $region52: #{tpu_custom_call.1} parent=39 // pred_fallthru
          _
        %s2576 = sand.u32 %s167, 1
        %s2577 = scalar_lea.sflag [#allocation5], %s2576
        %s2578 = sand.u32 %s167, 1
        %s2579 = smul.addr %s2578, 128
        %s2580 = scalar_lea.vmem [#allocation6], %s2579
        // Predicated region
        $region53: #{tpu_custom_call.1} parent=39 // pred_check
          %p2581 = pneg %p177
        $region54: #{tpu_custom_call.1} parent=39 // pred_check_branch
          %2583 = sbr.rel (%p2581) target = $region56
        $region55: #{tpu_custom_call.1} parent=39 // pred_region
          %2585 = vsyncadd %s2577, 0
          %s2586 = smul.addr %s26, 16
          %s2587 = smul.addr %s2586, 8
          %s2588 = scalar_lea.hbm %s5, %s2587
          %s2589 = sshll.u32 %s2580, 4
          %s2590 = int_to_ptr.vmem [resolvable:$true] %s2589
          %s2591 = sshll.u32 %s2588, 4
          %s2592 = int_to_ptr.hbm [resolvable:$true] %s2591
          %2597 = dma.vmem_to_hbm [thread:$0]  %s2590, 2048, %s2592, %s2577, 128, 128, 8
        $region56: #{tpu_custom_call.1} parent=39 // pred_fallthru
          _
      $region40: #{tpu_custom_call.1} parent=5 // pred_fallthru
        _
      %p2598 = scmp.le.s32.totalorder 2, %s17
      // Predicated region
      $region57: #{tpu_custom_call.1} parent=5 // pred_check
        %p2599 = pneg %p2598
      $region58: #{tpu_custom_call.1} parent=5 // pred_check_branch
        %2601 = sbr.rel (%p2599) target = $region60
      $region59: #{tpu_custom_call.1} parent=5 // pred_region
        %s2602 = ssub.s32 %s17, 2
        // Predicated region
        $region61: #{tpu_custom_call.1} parent=59 // pred_check
          %p2603 = pneg %p183
        $region62: #{tpu_custom_call.1} parent=59 // pred_check_branch
          %2605 = sbr.rel (%p2603) target = $region64
        $region63: #{tpu_custom_call.1} parent=59 // pred_region
          %s2606 = sand.u32 %s168, 1
          %s2607 = scalar_lea.sflag [#allocation5], %s2606
          %s2608 = sand.u32 %s168, 1
          %s2609 = smul.addr %s2608, 128
          %s2610 = scalar_lea.vmem [#allocation6], %s2609
          %2612 = dma.done %s2607, 2048
        $region64: #{tpu_custom_call.1} parent=59 // pred_fallthru
          _
      $region60: #{tpu_custom_call.1} parent=5 // pred_fallthru
        _
    $region6: #{tpu_custom_call.1} parent=1 // loop_footer
      %s21 = sadd.s32 1, %s17
    $region7: #{tpu_custom_call.1} parent=1 // loop_footer_branch
      %16 = sbr.rel target = $region3
    $region8: #{tpu_custom_call.1} parent=1 // loop_exit
      _
    %2613 = vsyncpa [#allocation4], 1
    %s2614 = scalar_lea.sflag [#allocation4], 1
    %2615 = vsyncpa %s2614, 1
    %2616 = vsyncpa [#allocation5], 1
    %s2617 = scalar_lea.sflag [#allocation5], 1
    %2618 = vsyncpa %s2617, 1

</llo_original>
